<compile_context>
chip_gen: v7x
topology: tpu7x:2x2x1
jax: 0.10.0
libtpu: 0.0.40
codegen_flags: <defaults>
</compile_context>

<pallas_src>
import math
import jax
import jax.numpy as jnp
from jax.experimental import pallas as pl
from jax.experimental.pallas import tpu as pltpu

C_IN, C_OUT, K, STRIDE = 527, 6, 8, 19
SCALE_POS = 2.63601
SCALE_NEG = -1.31601
N_PATCH = C_OUT * K * K          # 384 = 3*128 -> lane-dense, unmasked stores
CIN_PAD = 528                    # Cin rounded to a multiple of 16 (bf16 sublane tile)
TM_DEFAULT = 512                 # row tile; ~5.5 MB live VMEM incl. resident weights


def _round_up(x, n):
    return ((x + n - 1) // n) * n


# ---------------- single fused Pallas kernel --------------------------------
def _fused_kernel(x2d_ref, x2dT_ref, wA_ref, wB_ref, o_ref):
    # Conv-transpose core as one MXU matmul (no patch overlap since STRIDE > K).
    # bf16 operands, f32 accumulation.
    yA = jnp.dot(x2d_ref[...], wA_ref[...], preferred_element_type=jnp.float32)
    # "Read-transposed" patch values for the where condition: the H/W swap is
    # folded into the x2dT row order, the kh/kw swap into the packed weight wB,
    # so yB lands in the SAME (TM, 384) layout as yA — pure 2-D VPU select.
    yB = jnp.dot(x2dT_ref[...], wB_ref[...], preferred_element_type=jnp.float32)
    # Fused select-multiply (one vmul instead of two).
    scale = jnp.where(yB > 0, SCALE_POS, SCALE_NEG * SCALE_POS)
    o_ref[...] = yA * scale


def _fused_conv_where(x2d, x2dT, wA, wB, tm):
    m, cinp = x2d.shape
    nout = wA.shape[1]
    assert m % tm == 0
    return pl.pallas_call(
        _fused_kernel,
        out_shape=jax.ShapeDtypeStruct((m, nout), jnp.float32),
        grid=(m // tm,),
        in_specs=[
            pl.BlockSpec((tm, cinp), lambda i: (i, 0)),
            pl.BlockSpec((tm, cinp), lambda i: (i, 0)),
            # Constant block index -> packed weights fetched once, stay resident.
            pl.BlockSpec((cinp, nout), lambda i: (0, 0)),
            pl.BlockSpec((cinp, nout), lambda i: (0, 0)),
        ],
        out_specs=pl.BlockSpec((tm, nout), lambda i: (i, 0)),
        compiler_params=pltpu.CompilerParams(
            dimension_semantics=("parallel",),        # v7x megacore over row tiles
            vmem_limit_bytes=32 * 1024 * 1024,        # explicit budget (tiles ~5.5 MB)
        ),
    )(x2d, x2dT, wA, wB)


# ---------------- weight pre-packing (once, outside the hot path) -----------
def pack_weights(weight):
    """weight: (C_IN, C_OUT, K, K) f32 (torch ConvTranspose2d layout).

    Returns (wA, wB), both (CIN_PAD, C_OUT*K*K) bf16:
      wA[cin, (c,kh,kw)] = w[cin,c,kh,kw]   -- normal patches
      wB[cin, (c,kh,kw)] = w[cin,c,kw,kh]   -- kh/kw-swapped (transposed condition)
    Cin is zero-padded 527 -> 528 so every weight sublane tile is full.
    """
    wA = weight.reshape(C_IN, N_PATCH)
    wB = jnp.swapaxes(weight, 2, 3).reshape(C_IN, N_PATCH)
    pad = ((0, CIN_PAD - C_IN), (0, 0))
    return (jnp.pad(wA, pad).astype(jnp.bfloat16),
            jnp.pad(wB, pad).astype(jnp.bfloat16))


# ---------------- full forward (one jit: pallas + tiny layout glue) ---------
@jax.jit
def model_forward(x, wA, wB):
    """x: (N, C_IN, Hin, Win) f32; wA/wB: pre-packed bf16 weights."""
    n, cin, hin, win = x.shape
    assert cin == C_IN
    assert hin == win, "transposed condition requires a square output"
    assert STRIDE >= K, "no-overlap matmul decomposition needs stride >= kernel"
    hout = (hin - 1) * STRIDE + K
    wout = (win - 1) * STRIDE + K
    m = n * hin * win
    cinp = wA.shape[0]

    # One NCHW->NHWC transpose + bf16 cast + Cin zero-pad.  The transposed-row
    # stream is then a cheap swap of the two MAJOR axes (channels stay minor).
    x_nhwc = jnp.pad(jnp.transpose(x, (0, 2, 3, 1)).astype(jnp.bfloat16),
                     ((0, 0), (0, 0), (0, 0), (0, cinp - cin)))
    x2d = x_nhwc.reshape(m, cinp)                        # rows ordered (n, h, w)
    x2dT = jnp.swapaxes(x_nhwc, 1, 2).reshape(m, cinp)   # rows ordered (n, w, h)

    # Row tiling: pad M to a multiple of the row tile (padded rows -> zeros ->
    # zero outputs, sliced away below).
    tm = min(TM_DEFAULT, _round_up(m, 16))
    m_pad = _round_up(m, tm)
    if m_pad != m:
        x2d = jnp.pad(x2d, ((0, m_pad - m), (0, 0)))
        x2dT = jnp.pad(x2dT, ((0, m_pad - m), (0, 0)))

    # Fused conv-transpose core + scaled where, in patch layout (M, C_OUT*K*K).
    val = _fused_conv_where(x2d, x2dT, wA, wB, tm)[:m]

    # Pure-layout scatter of K x K patches onto the STRIDE grid; inter-patch
    # gaps are exactly zero.
    patches = val.reshape(n, hin, win, C_OUT, K, K)
    cells = jnp.pad(patches, ((0, 0), (0, 0), (0, 0), (0, 0),
                              (0, STRIDE - K), (0, STRIDE - K)))
    full = jnp.transpose(cells, (0, 3, 1, 4, 2, 5)).reshape(
        n, C_OUT, hin * STRIDE, win * STRIDE)
    return full[:, :, :hout, :wout]


# ---------------- pure-JAX f32 reference for a self-check --------------------
def reference_forward(x, weight):
    n, cin, hin, win = x.shape
    hout = (hin - 1) * STRIDE + K
    wout = (win - 1) * STRIDE + K
    patches = jnp.einsum('nchw,cokl->nhwokl', x, weight,
                         precision=jax.lax.Precision.HIGHEST)
    g2 = jnp.zeros((n, C_OUT, hout, wout), jnp.float32)
    for hi in range(hin):
        for wi in range(win):
            g2 = g2.at[:, :, hi * STRIDE:hi * STRIDE + K,
                       wi * STRIDE:wi * STRIDE + K].add(patches[:, hi, wi])
    g4 = g2 * SCALE_POS
    # TODO(synk): torch.transpose(g4, 4, 3) on a 4-D tensor raises in PyTorch
    # (dim 4 out of range); interpreted as swapping the last two dims, and the
    # module's final transpose then moves the swap onto the condition.
    cond = jnp.swapaxes(g2, -1, -2) > 0
    return jnp.where(cond, g4, SCALE_NEG * g4), g2


if __name__ == "__main__":
    key = jax.random.PRNGKey(0)
    kx, kw = jax.random.split(key)

    # Small shapes consistent with the module: channels fixed by __init__,
    # spatial 4x4 so the 65x65 output is square and the transpose is valid.
    # NOTE (perf review): at this size the kernel is launch/overhead bound;
    # the tiling/bf16 choices matter once M = N*Hin*Win reaches hundreds of rows.
    N, HIN, WIN = 2, 4, 4
    x = jax.random.normal(kx, (N, C_IN, HIN, WIN), dtype=jnp.float32)
    weight = jax.random.normal(kw, (C_IN, C_OUT, K, K), dtype=jnp.float32)
    weight = weight * (1.0 / math.sqrt(C_IN * K * K))

    wA, wB = pack_weights(weight)          # one-time packing, outside hot path

    out = model_forward(x, wA, wB)
    out = jax.block_until_ready(out)

    HOUT = (HIN - 1) * STRIDE + K
    WOUT = (WIN - 1) * STRIDE + K
    assert out.shape == (N, C_OUT, HOUT, WOUT), out.shape
    assert out.dtype == jnp.float32

    # Correctness self-check (tolerant where the select condition is ~0, since
    # bf16 MXU vs f32 XLA rounding can legitimately flip the branch there).
    ref, g2_ref = reference_forward(x, weight)
    close = jnp.isclose(out, ref, rtol=2e-2, atol=2e-2)
    cond_mag = jnp.abs(jnp.swapaxes(g2_ref, -1, -2))
    assert bool(jnp.all(close | (cond_mag < 5e-3))), "mismatch vs reference"

    print("KERNEL_OK")
</pallas_src>

<mosaic_0001>
module attributes {stable_mosaic.version = 11 : i64} {
  func.func @_fused_kernel(%arg0: i32, %arg1: memref<32x528xbf16, #tpu.memory_space<vmem>>, %arg2: memref<32x528xbf16, #tpu.memory_space<vmem>>, %arg3: memref<528x384xbf16, #tpu.memory_space<vmem>>, %arg4: memref<528x384xbf16, #tpu.memory_space<vmem>>, %arg5: memref<32x384xf32, #tpu.memory_space<vmem>>) attributes {dimension_semantics = [#tpu.dimension_semantics<parallel>], iteration_bounds = array<i64: 1>, scalar_prefetch = 0 : i64, scratch_operands = 0 : i64, tpu.core_type = #tpu.core_type<tc>, window_params = [{transform_indices = @transform_0, window_bounds = array<i64: 32, 528>}, {transform_indices = @transform_1, window_bounds = array<i64: 32, 528>}, {pipeline_mode = #tpu.pipeline_mode<synchronous>, transform_indices = @transform_2, window_bounds = array<i64: 528, 384>}, {pipeline_mode = #tpu.pipeline_mode<synchronous>, transform_indices = @transform_3, window_bounds = array<i64: 528, 384>}, {transform_indices = @transform_4, window_bounds = array<i64: 32, 384>}]} {
    %c0 = arith.constant 0 : index
    %c0_0 = arith.constant 0 : index
    %0 = vector.load %arg1[%c0, %c0_0] : memref<32x528xbf16, #tpu.memory_space<vmem>>, vector<32x528xbf16>
    %c0_1 = arith.constant 0 : index
    %c0_2 = arith.constant 0 : index
    %1 = vector.load %arg3[%c0_1, %c0_2] : memref<528x384xbf16, #tpu.memory_space<vmem>>, vector<528x384xbf16>
    %cst = arith.constant dense<0.000000e+00> : vector<32x384xf32>
    %2 = tpu.matmul %0, %1, %cst {dimension_numbers = #tpu.dot_dimension_numbers<[1], [0], [0], [1], [0, 0, 1, 1], [], []>} : vector<32x528xbf16>, vector<528x384xbf16>, vector<32x384xf32> -> vector<32x384xf32>
    %c0_3 = arith.constant 0 : index
    %c0_4 = arith.constant 0 : index
    %3 = vector.load %arg2[%c0_3, %c0_4] : memref<32x528xbf16, #tpu.memory_space<vmem>>, vector<32x528xbf16>
    %c0_5 = arith.constant 0 : index
    %c0_6 = arith.constant 0 : index
    %4 = vector.load %arg4[%c0_5, %c0_6] : memref<528x384xbf16, #tpu.memory_space<vmem>>, vector<528x384xbf16>
    %cst_7 = arith.constant dense<0.000000e+00> : vector<32x384xf32>
    %5 = tpu.matmul %3, %4, %cst_7 {dimension_numbers = #tpu.dot_dimension_numbers<[1], [0], [0], [1], [0, 0, 1, 1], [], []>} : vector<32x528xbf16>, vector<528x384xbf16>, vector<32x384xf32> -> vector<32x384xf32>
    %cst_8 = arith.constant 0.000000e+00 : f32
    %6 = vector.broadcast %cst_8 : f32 to vector<32x384xf32>
    %7 = arith.cmpf ogt, %5, %6 : vector<32x384xf32>
    %cst_9 = arith.constant 2.636010e+00 : f32
    %cst_10 = arith.constant -3.4690156 : f32
    %8 = vector.broadcast %cst_9 : f32 to vector<32x384xf32>
    %9 = vector.broadcast %cst_10 : f32 to vector<32x384xf32>
    %10 = arith.select %7, %8, %9 : vector<32x384xi1>, vector<32x384xf32>
    %11 = arith.mulf %2, %10 : vector<32x384xf32>
    %c0_11 = arith.constant 0 : index
    %c0_12 = arith.constant 0 : index
    %12 = vector.load %arg5[%c0_11, %c0_12] : memref<32x384xf32, #tpu.memory_space<vmem>>, vector<32x384xf32>
    tpu.vector_store %arg5[%c0_11, %c0_12], %11 {strides = array<i32>} : memref<32x384xf32, #tpu.memory_space<vmem>>, vector<32x384xf32>,
    return
  }
  func.func @transform_0(%arg0: i32) -> (i32, i32) {
    %c0_i32 = arith.constant 0 : i32
    %c0_i32_0 = arith.constant 0 : i32
    return %arg0, %c0_i32 : i32, i32
  }
  func.func @transform_1(%arg0: i32) -> (i32, i32) {
    %c0_i32 = arith.constant 0 : i32
    %c0_i32_0 = arith.constant 0 : i32
    return %arg0, %c0_i32 : i32, i32
  }
  func.func @transform_2(%arg0: i32) -> (i32, i32) {
    %c0_i32 = arith.constant 0 : i32
    %c0_i32_0 = arith.constant 0 : i32
    %c0_i32_1 = arith.constant 0 : i32
    return %c0_i32, %c0_i32_0 : i32, i32
  }
  func.func @transform_3(%arg0: i32) -> (i32, i32) {
    %c0_i32 = arith.constant 0 : i32
    %c0_i32_0 = arith.constant 0 : i32
    %c0_i32_1 = arith.constant 0 : i32
    return %c0_i32, %c0_i32_0 : i32, i32
  }
  func.func @transform_4(%arg0: i32) -> (i32, i32) {
    %c0_i32 = arith.constant 0 : i32
    %c0_i32_0 = arith.constant 0 : i32
    return %arg0, %c0_i32 : i32, i32
  }
}

</mosaic_0001>

<llo_original>
// kernel: model_forward.1
$region0: #{model_forward.1}
  #allocation0 [shape = 'u32[]', space=smem, size = 0x4, offset = 0x4, fixed_abs, tag = 'smem constant byte address 0x4 - core index']
  #allocation1 [shape = 'u32[144,128]{1,0:T(1,128)}', space=vmem, size = 0x12000, scoped, tag = 'internal scratch']
  %s0 = inlined_call_operand.vmem [shape: bf16[32,528], index: 0, kind: input, shape index: {}]
  %s1 = inlined_call_operand.vmem [shape: bf16[32,528], index: 1, kind: input, shape index: {}]
  %s2 = inlined_call_operand.hbm [shape: bf16[528,384], index: 2, kind: input, shape index: {}]
  %s3 = inlined_call_operand.hbm [shape: bf16[528,384], index: 3, kind: input, shape index: {}]
  %s4 = inlined_call_operand.vmem [shape: f32[32,384], index: 4, kind: output, shape index: {}]
  %s5 = sld [smem:[#allocation0]]
  $region34: #{model_forward.1} parent=0
    _
  %s7 = ssub.s32 1, %s5
  %s8 = scalar_select 0, %s7, %s5
  $region1: #{model_forward.1} parent=0
    #allocation2 [shape = 'u8[405504]{0}', space=vmem, size = 0x63000, scoped, tag = 'input window, operand 2, single buffered']
    #allocation3 [shape = 's32[1]{0}', space=sflag, size = 0x4, scoped, tag = 'scoped memory for model_forward.1']
    #allocation4 [shape = 'u8[405504]{0}', space=vmem, size = 0x63000, scoped, tag = 'input window, operand 3, single buffered']
    #allocation5 [shape = 's32[1]{0}', space=sflag, size = 0x4, scoped, tag = 'scoped memory for model_forward.1']
    %9 = vsyncpa [#allocation3], 0
    %10 = vsyncpa [#allocation5], 0
    // Predicated region
    $region2: #{model_forward.1} parent=1 // pred_check
      _
    $region3: #{model_forward.1} parent=1 // pred_check_branch
      %12 = sbr.rel (0) target = $region5
    $region4: #{model_forward.1} parent=1 // pred_region
      _
    $region5: #{model_forward.1} parent=1 // pred_fallthru
      _
    // Predicated region
    $region6: #{model_forward.1} parent=1 // pred_check
      _
    $region7: #{model_forward.1} parent=1 // pred_check_branch
      %14 = sbr.rel (0) target = $region9
    $region8: #{model_forward.1} parent=1 // pred_region
      _
    $region9: #{model_forward.1} parent=1 // pred_fallthru
      _
    // Predicated region
    $region10: #{model_forward.1} parent=1 // pred_check
      _
    $region11: #{model_forward.1} parent=1 // pred_check_branch
      %16 = sbr.rel (0) target = $region13
    $region12: #{model_forward.1} parent=1 // pred_region
      %s18 = ssub.s32 12672, 12672
      %19 = vsyncadd [#allocation3], %s18
      %s20 = sshll.u32 [#allocation2], 4
      %s21 = int_to_ptr.vmem [resolvable:$true] %s20
      %26 = dma.hbm_to_vmem [thread:$0]  %s2, 12672, %s21, [#allocation3], 192, 192, 12
    $region13: #{model_forward.1} parent=1 // pred_fallthru
      _
    // Predicated region
    $region14: #{model_forward.1} parent=1 // pred_check
      _
    $region15: #{model_forward.1} parent=1 // pred_check_branch
      %28 = sbr.rel (0) target = $region17
    $region16: #{model_forward.1} parent=1 // pred_region
      %s30 = ssub.s32 12672, 12672
      %31 = vsyncadd [#allocation5], %s30
      %s32 = sshll.u32 [#allocation4], 4
      %s33 = int_to_ptr.vmem [resolvable:$true] %s32
      %38 = dma.hbm_to_vmem [thread:$0]  %s3, 12672, %s33, [#allocation5], 192, 192, 12
    $region17: #{model_forward.1} parent=1 // pred_fallthru
      _
    // Predicated region
    $region18: #{model_forward.1} parent=1 // pred_check
      _
    $region19: #{model_forward.1} parent=1 // pred_check_branch
      %40 = sbr.rel (0) target = $region21
    $region20: #{model_forward.1} parent=1 // pred_region
      %41 = dma.done [#allocation3], 12672
    $region21: #{model_forward.1} parent=1 // pred_fallthru
      _
    // Predicated region
    $region22: #{model_forward.1} parent=1 // pred_check
      _
    $region23: #{model_forward.1} parent=1 // pred_check_branch
      %43 = sbr.rel (0) target = $region25
    $region24: #{model_forward.1} parent=1 // pred_region
      %44 = dma.done [#allocation5], 12672
    $region25: #{model_forward.1} parent=1 // pred_fallthru
      _
    %v46 = vld [vmem:[%s0] sm:$0xff]
    %v47 = vld [vmem:[%s0 + $0x8] sm:$0xff]
    %v48 = vld [vmem:[%s0 + $0x10] sm:$0xf]
    %v49 = vld [vmem:[%s0 + $0x14] sm:$0xff]
    %v50 = vld [vmem:[%s0 + $0x1c] sm:$0xff]
    %v51 = vld [vmem:[%s0 + $0x24] sm:$0xf]
    %v52 = vld [vmem:[%s0 + $0x28] sm:$0xff]
    %v53 = vld [vmem:[%s0 + $0x30] sm:$0xff]
    %v54 = vld [vmem:[%s0 + $0x38] sm:$0xf]
    %v55 = vld [vmem:[%s0 + $0x3c] sm:$0xff]
    %v56 = vld [vmem:[%s0 + $0x44] sm:$0xff]
    %v57 = vld [vmem:[%s0 + $0x4c] sm:$0xf]
    %v58 = vld [vmem:[#allocation2] sm:$0xff]
    %v59 = vld [vmem:[#allocation2 + $0x8] sm:$0xf]
    %v60 = vld [vmem:[#allocation2 + $0xc] sm:$0xff]
    %v61 = vld [vmem:[#allocation2 + $0x14] sm:$0xf]
    %v62 = vld [vmem:[#allocation2 + $0x18] sm:$0xff]
    %v63 = vld [vmem:[#allocation2 + $0x20] sm:$0xf]
    %v64 = vld [vmem:[#allocation2 + $0x24] sm:$0xff]
    %v65 = vld [vmem:[#allocation2 + $0x2c] sm:$0xf]
    %v66 = vld [vmem:[#allocation2 + $0x30] sm:$0xff]
    %v67 = vld [vmem:[#allocation2 + $0x38] sm:$0xf]
    %v68 = vld [vmem:[#allocation2 + $0x3c] sm:$0xff]
    %v69 = vld [vmem:[#allocation2 + $0x44] sm:$0xf]
    %v70 = vld [vmem:[#allocation2 + $0x48] sm:$0xff]
    %v71 = vld [vmem:[#allocation2 + $0x50] sm:$0xf]
    %v72 = vld [vmem:[#allocation2 + $0x54] sm:$0xff]
    %v73 = vld [vmem:[#allocation2 + $0x5c] sm:$0xf]
    %v74 = vld [vmem:[#allocation2 + $0x60] sm:$0xff]
    %v75 = vld [vmem:[#allocation2 + $0x68] sm:$0xf]
    %v76 = vld [vmem:[#allocation2 + $0x6c] sm:$0xff]
    %v77 = vld [vmem:[#allocation2 + $0x74] sm:$0xf]
    %v78 = vld [vmem:[#allocation2 + $0x78] sm:$0xff]
    %v79 = vld [vmem:[#allocation2 + $0x80] sm:$0xf]
    %v80 = vld [vmem:[#allocation2 + $0x84] sm:$0xff]
    %v81 = vld [vmem:[#allocation2 + $0x8c] sm:$0xf]
    %v82 = vld [vmem:[#allocation2 + $0x90] sm:$0xff]
    %v83 = vld [vmem:[#allocation2 + $0x98] sm:$0xf]
    %v84 = vld [vmem:[#allocation2 + $0x9c] sm:$0xff]
    %v85 = vld [vmem:[#allocation2 + $0xa4] sm:$0xf]
    %v86 = vld [vmem:[#allocation2 + $0xa8] sm:$0xff]
    %v87 = vld [vmem:[#allocation2 + $0xb0] sm:$0xf]
    %v88 = vld [vmem:[#allocation2 + $0xb4] sm:$0xff]
    %v89 = vld [vmem:[#allocation2 + $0xbc] sm:$0xf]
    %v90 = vld [vmem:[#allocation2 + $0xc0] sm:$0xff]
    %v91 = vld [vmem:[#allocation2 + $0xc8] sm:$0xf]
    %v92 = vld [vmem:[#allocation2 + $0xcc] sm:$0xff]
    %v93 = vld [vmem:[#allocation2 + $0xd4] sm:$0xf]
    %v94 = vld [vmem:[#allocation2 + $0xd8] sm:$0xff]
    %v95 = vld [vmem:[#allocation2 + $0xe0] sm:$0xf]
    %v96 = vld [vmem:[#allocation2 + $0xe4] sm:$0xff]
    %v97 = vld [vmem:[#allocation2 + $0xec] sm:$0xf]
    %v98 = vld [vmem:[#allocation2 + $0xf0] sm:$0xff]
    %v99 = vld [vmem:[#allocation2 + $0xf8] sm:$0xf]
    %v100 = vld [vmem:[#allocation2 + $0xfc] sm:$0xff]
    %v101 = vld [vmem:[#allocation2 + $0x104] sm:$0xf]
    %v102 = vld [vmem:[#allocation2 + $0x108] sm:$0xff]
    %v103 = vld [vmem:[#allocation2 + $0x110] sm:$0xf]
    %v104 = vld [vmem:[#allocation2 + $0x114] sm:$0xff]
    %v105 = vld [vmem:[#allocation2 + $0x11c] sm:$0xf]
    %v106 = vld [vmem:[#allocation2 + $0x120] sm:$0xff]
    %v107 = vld [vmem:[#allocation2 + $0x128] sm:$0xf]
    %v108 = vld [vmem:[#allocation2 + $0x12c] sm:$0xff]
    %v109 = vld [vmem:[#allocation2 + $0x134] sm:$0xf]
    %v110 = vld [vmem:[#allocation2 + $0x138] sm:$0xff]
    %v111 = vld [vmem:[#allocation2 + $0x140] sm:$0xf]
    %v112 = vld [vmem:[#allocation2 + $0x144] sm:$0xff]
    %v113 = vld [vmem:[#allocation2 + $0x14c] sm:$0xf]
    %v114 = vld [vmem:[#allocation2 + $0x150] sm:$0xff]
    %v115 = vld [vmem:[#allocation2 + $0x158] sm:$0xf]
    %v116 = vld [vmem:[#allocation2 + $0x15c] sm:$0xff]
    %v117 = vld [vmem:[#allocation2 + $0x164] sm:$0xf]
    %v118 = vld [vmem:[#allocation2 + $0x168] sm:$0xff]
    %v119 = vld [vmem:[#allocation2 + $0x170] sm:$0xf]
    %v120 = vld [vmem:[#allocation2 + $0x174] sm:$0xff]
    %v121 = vld [vmem:[#allocation2 + $0x17c] sm:$0xf]
    %v122 = vld [vmem:[#allocation2 + $0x180] sm:$0xff]
    %v123 = vld [vmem:[#allocation2 + $0x188] sm:$0xf]
    %v124 = vld [vmem:[#allocation2 + $0x18c] sm:$0xff]
    %v125 = vld [vmem:[#allocation2 + $0x194] sm:$0xf]
    %v126 = vld [vmem:[#allocation2 + $0x198] sm:$0xff]
    %v127 = vld [vmem:[#allocation2 + $0x1a0] sm:$0xf]
    %v128 = vld [vmem:[#allocation2 + $0x1a4] sm:$0xff]
    %v129 = vld [vmem:[#allocation2 + $0x1ac] sm:$0xf]
    %v130 = vld [vmem:[#allocation2 + $0x1b0] sm:$0xff]
    %v131 = vld [vmem:[#allocation2 + $0x1b8] sm:$0xf]
    %v132 = vld [vmem:[#allocation2 + $0x1bc] sm:$0xff]
    %v133 = vld [vmem:[#allocation2 + $0x1c4] sm:$0xf]
    %v134 = vld [vmem:[#allocation2 + $0x1c8] sm:$0xff]
    %v135 = vld [vmem:[#allocation2 + $0x1d0] sm:$0xf]
    %v136 = vld [vmem:[#allocation2 + $0x1d4] sm:$0xff]
    %v137 = vld [vmem:[#allocation2 + $0x1dc] sm:$0xf]
    %v138 = vld [vmem:[#allocation2 + $0x1e0] sm:$0xff]
    %v139 = vld [vmem:[#allocation2 + $0x1e8] sm:$0xf]
    %v140 = vld [vmem:[#allocation2 + $0x1ec] sm:$0xff]
    %v141 = vld [vmem:[#allocation2 + $0x1f4] sm:$0xf]
    %v142 = vld [vmem:[#allocation2 + $0x1f8] sm:$0xff]
    %v143 = vld [vmem:[#allocation2 + $0x200] sm:$0xf]
    %v144 = vld [vmem:[#allocation2 + $0x204] sm:$0xff]
    %v145 = vld [vmem:[#allocation2 + $0x20c] sm:$0xf]
    %v146 = vld [vmem:[#allocation2 + $0x210] sm:$0xff]
    %v147 = vld [vmem:[#allocation2 + $0x218] sm:$0xf]
    %v148 = vld [vmem:[#allocation2 + $0x21c] sm:$0xff]
    %v149 = vld [vmem:[#allocation2 + $0x224] sm:$0xf]
    %v150 = vld [vmem:[#allocation2 + $0x228] sm:$0xff]
    %v151 = vld [vmem:[#allocation2 + $0x230] sm:$0xf]
    %v152 = vld [vmem:[#allocation2 + $0x234] sm:$0xff]
    %v153 = vld [vmem:[#allocation2 + $0x23c] sm:$0xf]
    %v154 = vld [vmem:[#allocation2 + $0x240] sm:$0xff]
    %v155 = vld [vmem:[#allocation2 + $0x248] sm:$0xf]
    %v156 = vld [vmem:[#allocation2 + $0x24c] sm:$0xff]
    %v157 = vld [vmem:[#allocation2 + $0x254] sm:$0xf]
    %v158 = vld [vmem:[#allocation2 + $0x258] sm:$0xff]
    %v159 = vld [vmem:[#allocation2 + $0x260] sm:$0xf]
    %v160 = vld [vmem:[#allocation2 + $0x264] sm:$0xff]
    %v161 = vld [vmem:[#allocation2 + $0x26c] sm:$0xf]
    %v162 = vld [vmem:[#allocation2 + $0x270] sm:$0xff]
    %v163 = vld [vmem:[#allocation2 + $0x278] sm:$0xf]
    %v164 = vld [vmem:[#allocation2 + $0x27c] sm:$0xff]
    %v165 = vld [vmem:[#allocation2 + $0x284] sm:$0xf]
    %v166 = vld [vmem:[#allocation2 + $0x288] sm:$0xff]
    %v167 = vld [vmem:[#allocation2 + $0x290] sm:$0xf]
    %v168 = vld [vmem:[#allocation2 + $0x294] sm:$0xff]
    %v169 = vld [vmem:[#allocation2 + $0x29c] sm:$0xf]
    %v170 = vld [vmem:[#allocation2 + $0x2a0] sm:$0xff]
    %v171 = vld [vmem:[#allocation2 + $0x2a8] sm:$0xf]
    %v172 = vld [vmem:[#allocation2 + $0x2ac] sm:$0xff]
    %v173 = vld [vmem:[#allocation2 + $0x2b4] sm:$0xf]
    %v174 = vld [vmem:[#allocation2 + $0x2b8] sm:$0xff]
    %v175 = vld [vmem:[#allocation2 + $0x2c0] sm:$0xf]
    %v176 = vld [vmem:[#allocation2 + $0x2c4] sm:$0xff]
    %v177 = vld [vmem:[#allocation2 + $0x2cc] sm:$0xf]
    %v178 = vld [vmem:[#allocation2 + $0x2d0] sm:$0xff]
    %v179 = vld [vmem:[#allocation2 + $0x2d8] sm:$0xf]
    %v180 = vld [vmem:[#allocation2 + $0x2dc] sm:$0xff]
    %v181 = vld [vmem:[#allocation2 + $0x2e4] sm:$0xf]
    %v182 = vld [vmem:[#allocation2 + $0x2e8] sm:$0xff]
    %v183 = vld [vmem:[#allocation2 + $0x2f0] sm:$0xf]
    %v184 = vld [vmem:[#allocation2 + $0x2f4] sm:$0xff]
    %v185 = vld [vmem:[#allocation2 + $0x2fc] sm:$0xf]
    %v186 = vld [vmem:[#allocation2 + $0x300] sm:$0xff]
    %v187 = vld [vmem:[#allocation2 + $0x308] sm:$0xf]
    %v188 = vld [vmem:[#allocation2 + $0x30c] sm:$0xff]
    %v189 = vld [vmem:[#allocation2 + $0x314] sm:$0xf]
    %v202 = vunpack.c.l.b16 %v46
    %v203 = vunpack.c.h.b16 %v46
    %v204 = vunpack.c.l.b16 %v47
    %v205 = vunpack.c.h.b16 %v47
    %v206 = vunpack.c.l.b16 %v48
    %v207 = vunpack.c.l.b16 %v49
    %v208 = vunpack.c.h.b16 %v49
    %v209 = vunpack.c.l.b16 %v50
    %v210 = vunpack.c.h.b16 %v50
    %v211 = vunpack.c.l.b16 %v51
    %v212 = vunpack.c.l.b16 %v52
    %v213 = vunpack.c.h.b16 %v52
    %v214 = vunpack.c.l.b16 %v53
    %v215 = vunpack.c.h.b16 %v53
    %v216 = vunpack.c.l.b16 %v54
    %v217 = vunpack.c.l.b16 %v55
    %v218 = vunpack.c.h.b16 %v55
    %v219 = vunpack.c.l.b16 %v56
    %v220 = vunpack.c.h.b16 %v56
    %v221 = vunpack.c.l.b16 %v57
    %v222 = vpack.c.b16 %v207, %v202
    %v223 = vpack.c.b16 %v208, %v203
    %v224 = vpack.c.b16 %v209, %v204
    %v225 = vpack.c.b16 %v210, %v205
    %v226 = vpack.c.b16 %v211, %v206
    %v227 = vpack.c.b16 %v217, %v212
    %v228 = vpack.c.b16 %v218, %v213
    %v229 = vpack.c.b16 %v219, %v214
    %v230 = vpack.c.b16 %v220, %v215
    %v231 = vpack.c.b16 %v221, %v216
    %v372 = vunpack.c.l.b16 %v58
    %v373 = vunpack.c.h.b16 %v58
    %v374 = vunpack.c.l.b16 %v59
    %v375 = vunpack.c.l.b16 %v60
    %v376 = vunpack.c.h.b16 %v60
    %v377 = vunpack.c.l.b16 %v61
    %v378 = vunpack.c.l.b16 %v62
    %v379 = vunpack.c.h.b16 %v62
    %v380 = vunpack.c.l.b16 %v63
    %v381 = vunpack.c.l.b16 %v64
    %v382 = vunpack.c.h.b16 %v64
    %v383 = vunpack.c.l.b16 %v65
    %v384 = vunpack.c.l.b16 %v66
    %v385 = vunpack.c.h.b16 %v66
    %v386 = vunpack.c.l.b16 %v67
    %v387 = vunpack.c.l.b16 %v68
    %v388 = vunpack.c.h.b16 %v68
    %v389 = vunpack.c.l.b16 %v69
    %v390 = vunpack.c.l.b16 %v70
    %v391 = vunpack.c.h.b16 %v70
    %v392 = vunpack.c.l.b16 %v71
    %v393 = vunpack.c.l.b16 %v72
    %v394 = vunpack.c.h.b16 %v72
    %v395 = vunpack.c.l.b16 %v73
    %v396 = vunpack.c.l.b16 %v74
    %v397 = vunpack.c.h.b16 %v74
    %v398 = vunpack.c.l.b16 %v75
    %v399 = vunpack.c.l.b16 %v76
    %v400 = vunpack.c.h.b16 %v76
    %v401 = vunpack.c.l.b16 %v77
    %v402 = vunpack.c.l.b16 %v78
    %v403 = vunpack.c.h.b16 %v78
    %v404 = vunpack.c.l.b16 %v79
    %v405 = vunpack.c.l.b16 %v80
    %v406 = vunpack.c.h.b16 %v80
    %v407 = vunpack.c.l.b16 %v81
    %v408 = vunpack.c.l.b16 %v82
    %v409 = vunpack.c.h.b16 %v82
    %v410 = vunpack.c.l.b16 %v83
    %v411 = vunpack.c.l.b16 %v84
    %v412 = vunpack.c.h.b16 %v84
    %v413 = vunpack.c.l.b16 %v85
    %v414 = vunpack.c.l.b16 %v86
    %v415 = vunpack.c.h.b16 %v86
    %v416 = vunpack.c.l.b16 %v87
    %v417 = vunpack.c.l.b16 %v88
    %v418 = vunpack.c.h.b16 %v88
    %v419 = vunpack.c.l.b16 %v89
    %v420 = vunpack.c.l.b16 %v90
    %v421 = vunpack.c.h.b16 %v90
    %v422 = vunpack.c.l.b16 %v91
    %v423 = vunpack.c.l.b16 %v92
    %v424 = vunpack.c.h.b16 %v92
    %v425 = vunpack.c.l.b16 %v93
    %v426 = vunpack.c.l.b16 %v94
    %v427 = vunpack.c.h.b16 %v94
    %v428 = vunpack.c.l.b16 %v95
    %v429 = vunpack.c.l.b16 %v96
    %v430 = vunpack.c.h.b16 %v96
    %v431 = vunpack.c.l.b16 %v97
    %v432 = vunpack.c.l.b16 %v98
    %v433 = vunpack.c.h.b16 %v98
    %v434 = vunpack.c.l.b16 %v99
    %v435 = vunpack.c.l.b16 %v100
    %v436 = vunpack.c.h.b16 %v100
    %v437 = vunpack.c.l.b16 %v101
    %v438 = vunpack.c.l.b16 %v102
    %v439 = vunpack.c.h.b16 %v102
    %v440 = vunpack.c.l.b16 %v103
    %v441 = vunpack.c.l.b16 %v104
    %v442 = vunpack.c.h.b16 %v104
    %v443 = vunpack.c.l.b16 %v105
    %v444 = vunpack.c.l.b16 %v106
    %v445 = vunpack.c.h.b16 %v106
    %v446 = vunpack.c.l.b16 %v107
    %v447 = vunpack.c.l.b16 %v108
    %v448 = vunpack.c.h.b16 %v108
    %v449 = vunpack.c.l.b16 %v109
    %v450 = vunpack.c.l.b16 %v110
    %v451 = vunpack.c.h.b16 %v110
    %v452 = vunpack.c.l.b16 %v111
    %v453 = vunpack.c.l.b16 %v112
    %v454 = vunpack.c.h.b16 %v112
    %v455 = vunpack.c.l.b16 %v113
    %v456 = vunpack.c.l.b16 %v114
    %v457 = vunpack.c.h.b16 %v114
    %v458 = vunpack.c.l.b16 %v115
    %v459 = vunpack.c.l.b16 %v116
    %v460 = vunpack.c.h.b16 %v116
    %v461 = vunpack.c.l.b16 %v117
    %v462 = vunpack.c.l.b16 %v118
    %v463 = vunpack.c.h.b16 %v118
    %v464 = vunpack.c.l.b16 %v119
    %v465 = vunpack.c.l.b16 %v120
    %v466 = vunpack.c.h.b16 %v120
    %v467 = vunpack.c.l.b16 %v121
    %v468 = vunpack.c.l.b16 %v122
    %v469 = vunpack.c.h.b16 %v122
    %v470 = vunpack.c.l.b16 %v123
    %v471 = vunpack.c.l.b16 %v124
    %v472 = vunpack.c.h.b16 %v124
    %v473 = vunpack.c.l.b16 %v125
    %v474 = vunpack.c.l.b16 %v126
    %v475 = vunpack.c.h.b16 %v126
    %v476 = vunpack.c.l.b16 %v127
    %v477 = vunpack.c.l.b16 %v128
    %v478 = vunpack.c.h.b16 %v128
    %v479 = vunpack.c.l.b16 %v129
    %v480 = vunpack.c.l.b16 %v130
    %v481 = vunpack.c.h.b16 %v130
    %v482 = vunpack.c.l.b16 %v131
    %v483 = vunpack.c.l.b16 %v132
    %v484 = vunpack.c.h.b16 %v132
    %v485 = vunpack.c.l.b16 %v133
    %v486 = vunpack.c.l.b16 %v134
    %v487 = vunpack.c.h.b16 %v134
    %v488 = vunpack.c.l.b16 %v135
    %v489 = vunpack.c.l.b16 %v136
    %v490 = vunpack.c.h.b16 %v136
    %v491 = vunpack.c.l.b16 %v137
    %v492 = vunpack.c.l.b16 %v138
    %v493 = vunpack.c.h.b16 %v138
    %v494 = vunpack.c.l.b16 %v139
    %v495 = vunpack.c.l.b16 %v140
    %v496 = vunpack.c.h.b16 %v140
    %v497 = vunpack.c.l.b16 %v141
    %v498 = vunpack.c.l.b16 %v142
    %v499 = vunpack.c.h.b16 %v142
    %v500 = vunpack.c.l.b16 %v143
    %v501 = vunpack.c.l.b16 %v144
    %v502 = vunpack.c.h.b16 %v144
    %v503 = vunpack.c.l.b16 %v145
    %v504 = vunpack.c.l.b16 %v146
    %v505 = vunpack.c.h.b16 %v146
    %v506 = vunpack.c.l.b16 %v147
    %v507 = vunpack.c.l.b16 %v148
    %v508 = vunpack.c.h.b16 %v148
    %v509 = vunpack.c.l.b16 %v149
    %v510 = vunpack.c.l.b16 %v150
    %v511 = vunpack.c.h.b16 %v150
    %v512 = vunpack.c.l.b16 %v151
    %v513 = vunpack.c.l.b16 %v152
    %v514 = vunpack.c.h.b16 %v152
    %v515 = vunpack.c.l.b16 %v153
    %v516 = vunpack.c.l.b16 %v154
    %v517 = vunpack.c.h.b16 %v154
    %v518 = vunpack.c.l.b16 %v155
    %v519 = vunpack.c.l.b16 %v156
    %v520 = vunpack.c.h.b16 %v156
    %v521 = vunpack.c.l.b16 %v157
    %v522 = vunpack.c.l.b16 %v158
    %v523 = vunpack.c.h.b16 %v158
    %v524 = vunpack.c.l.b16 %v159
    %v525 = vunpack.c.l.b16 %v160
    %v526 = vunpack.c.h.b16 %v160
    %v527 = vunpack.c.l.b16 %v161
    %v528 = vunpack.c.l.b16 %v162
    %v529 = vunpack.c.h.b16 %v162
    %v530 = vunpack.c.l.b16 %v163
    %v531 = vunpack.c.l.b16 %v164
    %v532 = vunpack.c.h.b16 %v164
    %v533 = vunpack.c.l.b16 %v165
    %v534 = vunpack.c.l.b16 %v166
    %v535 = vunpack.c.h.b16 %v166
    %v536 = vunpack.c.l.b16 %v167
    %v537 = vunpack.c.l.b16 %v168
    %v538 = vunpack.c.h.b16 %v168
    %v539 = vunpack.c.l.b16 %v169
    %v540 = vunpack.c.l.b16 %v170
    %v541 = vunpack.c.h.b16 %v170
    %v542 = vunpack.c.l.b16 %v171
    %v543 = vunpack.c.l.b16 %v172
    %v544 = vunpack.c.h.b16 %v172
    %v545 = vunpack.c.l.b16 %v173
    %v546 = vunpack.c.l.b16 %v174
    %v547 = vunpack.c.h.b16 %v174
    %v548 = vunpack.c.l.b16 %v175
    %v549 = vunpack.c.l.b16 %v176
    %v550 = vunpack.c.h.b16 %v176
    %v551 = vunpack.c.l.b16 %v177
    %v552 = vunpack.c.l.b16 %v178
    %v553 = vunpack.c.h.b16 %v178
    %v554 = vunpack.c.l.b16 %v179
    %v555 = vunpack.c.l.b16 %v180
    %v556 = vunpack.c.h.b16 %v180
    %v557 = vunpack.c.l.b16 %v181
    %v558 = vunpack.c.l.b16 %v182
    %v559 = vunpack.c.h.b16 %v182
    %v560 = vunpack.c.l.b16 %v183
    %v561 = vunpack.c.l.b16 %v184
    %v562 = vunpack.c.h.b16 %v184
    %v563 = vunpack.c.l.b16 %v185
    %v564 = vunpack.c.l.b16 %v186
    %v565 = vunpack.c.h.b16 %v186
    %v566 = vunpack.c.l.b16 %v187
    %v567 = vunpack.c.l.b16 %v188
    %v568 = vunpack.c.h.b16 %v188
    %v569 = vunpack.c.l.b16 %v189
    %v570 = vpack.c.b16 %v375, %v372
    %v571 = vpack.c.b16 %v376, %v373
    %v572 = vpack.c.b16 %v377, %v374
    %v573 = vpack.c.b16 %v381, %v378
    %v574 = vpack.c.b16 %v382, %v379
    %v575 = vpack.c.b16 %v383, %v380
    %v576 = vpack.c.b16 %v387, %v384
    %v577 = vpack.c.b16 %v388, %v385
    %v578 = vpack.c.b16 %v389, %v386
    %v579 = vpack.c.b16 %v393, %v390
    %v580 = vpack.c.b16 %v394, %v391
    %v581 = vpack.c.b16 %v395, %v392
    %v582 = vpack.c.b16 %v399, %v396
    %v583 = vpack.c.b16 %v400, %v397
    %v584 = vpack.c.b16 %v401, %v398
    %v585 = vpack.c.b16 %v405, %v402
    %v586 = vpack.c.b16 %v406, %v403
    %v587 = vpack.c.b16 %v407, %v404
    %v588 = vpack.c.b16 %v411, %v408
    %v589 = vpack.c.b16 %v412, %v409
    %v590 = vpack.c.b16 %v413, %v410
    %v591 = vpack.c.b16 %v417, %v414
    %v592 = vpack.c.b16 %v418, %v415
    %v593 = vpack.c.b16 %v419, %v416
    %v594 = vpack.c.b16 %v423, %v420
    %v595 = vpack.c.b16 %v424, %v421
    %v596 = vpack.c.b16 %v425, %v422
    %v597 = vpack.c.b16 %v429, %v426
    %v598 = vpack.c.b16 %v430, %v427
    %v599 = vpack.c.b16 %v431, %v428
    %v600 = vpack.c.b16 %v435, %v432
    %v601 = vpack.c.b16 %v436, %v433
    %v602 = vpack.c.b16 %v437, %v434
    %v603 = vpack.c.b16 %v441, %v438
    %v604 = vpack.c.b16 %v442, %v439
    %v605 = vpack.c.b16 %v443, %v440
    %v606 = vpack.c.b16 %v447, %v444
    %v607 = vpack.c.b16 %v448, %v445
    %v608 = vpack.c.b16 %v449, %v446
    %v609 = vpack.c.b16 %v453, %v450
    %v610 = vpack.c.b16 %v454, %v451
    %v611 = vpack.c.b16 %v455, %v452
    %v612 = vpack.c.b16 %v459, %v456
    %v613 = vpack.c.b16 %v460, %v457
    %v614 = vpack.c.b16 %v461, %v458
    %v615 = vpack.c.b16 %v465, %v462
    %v616 = vpack.c.b16 %v466, %v463
    %v617 = vpack.c.b16 %v467, %v464
    %v618 = vpack.c.b16 %v471, %v468
    %v619 = vpack.c.b16 %v472, %v469
    %v620 = vpack.c.b16 %v473, %v470
    %v621 = vpack.c.b16 %v477, %v474
    %v622 = vpack.c.b16 %v478, %v475
    %v623 = vpack.c.b16 %v479, %v476
    %v624 = vpack.c.b16 %v483, %v480
    %v625 = vpack.c.b16 %v484, %v481
    %v626 = vpack.c.b16 %v485, %v482
    %v627 = vpack.c.b16 %v489, %v486
    %v628 = vpack.c.b16 %v490, %v487
    %v629 = vpack.c.b16 %v491, %v488
    %v630 = vpack.c.b16 %v495, %v492
    %v631 = vpack.c.b16 %v496, %v493
    %v632 = vpack.c.b16 %v497, %v494
    %v633 = vpack.c.b16 %v501, %v498
    %v634 = vpack.c.b16 %v502, %v499
    %v635 = vpack.c.b16 %v503, %v500
    %v636 = vpack.c.b16 %v507, %v504
    %v637 = vpack.c.b16 %v508, %v505
    %v638 = vpack.c.b16 %v509, %v506
    %v639 = vpack.c.b16 %v513, %v510
    %v640 = vpack.c.b16 %v514, %v511
    %v641 = vpack.c.b16 %v515, %v512
    %v642 = vpack.c.b16 %v519, %v516
    %v643 = vpack.c.b16 %v520, %v517
    %v644 = vpack.c.b16 %v521, %v518
    %v645 = vpack.c.b16 %v525, %v522
    %v646 = vpack.c.b16 %v526, %v523
    %v647 = vpack.c.b16 %v527, %v524
    %v648 = vpack.c.b16 %v531, %v528
    %v649 = vpack.c.b16 %v532, %v529
    %v650 = vpack.c.b16 %v533, %v530
    %v651 = vpack.c.b16 %v537, %v534
    %v652 = vpack.c.b16 %v538, %v535
    %v653 = vpack.c.b16 %v539, %v536
    %v654 = vpack.c.b16 %v543, %v540
    %v655 = vpack.c.b16 %v544, %v541
    %v656 = vpack.c.b16 %v545, %v542
    %v657 = vpack.c.b16 %v549, %v546
    %v658 = vpack.c.b16 %v550, %v547
    %v659 = vpack.c.b16 %v551, %v548
    %v660 = vpack.c.b16 %v555, %v552
    %v661 = vpack.c.b16 %v556, %v553
    %v662 = vpack.c.b16 %v557, %v554
    %v663 = vpack.c.b16 %v561, %v558
    %v664 = vpack.c.b16 %v562, %v559
    %v665 = vpack.c.b16 %v563, %v560
    %v666 = vpack.c.b16 %v567, %v564
    %v667 = vpack.c.b16 %v568, %v565
    %v668 = vpack.c.b16 %v569, %v566
    %vm768 = vcmask 130048
    %v770 = vsel %vm768, %v226, 0
    %v773 = vsel %vm768, %v231, 0
    %775 = vmatprep.subr.bf16.mxu0 %v571
    %776 = vmatpush1.bf16.msra.mxu0 %v570
    %777 = vmatprep.subr.bf16.mxu0 %v574
    %778 = vmatpush1.bf16.msra.mxu0 %v573
    %779 = vmatprep.subr.bf16.mxu0 %v577
    %780 = vmatpush1.bf16.msra.mxu0 %v576
    %781 = vmatprep.subr.bf16.mxu0 %v580
    %782 = vmatpush1.bf16.msra.mxu0 %v579
    %783 = vmatprep.subr.bf16.mxu0 %v583
    %784 = vmatpush1.bf16.msra.mxu0 %v582
    %785 = vmatprep.subr.bf16.mxu0 %v586
    %786 = vmatpush1.bf16.msra.mxu0 %v585
    %787 = vmatprep.subr.bf16.mxu0 %v589
    %788 = vmatpush1.bf16.msra.mxu0 %v588
    %789 = vmatprep.subr.bf16.mxu0 %v592
    %790 = vmatpush1.bf16.msra.mxu0 %v591
    %791 = vmatprep.subr.bf16.mxu0 %v595
    %792 = vmatpush1.bf16.msra.mxu0 %v594
    %793 = vmatprep.subr.bf16.mxu0 %v598
    %794 = vmatpush1.bf16.msra.mxu0 %v597
    %795 = vmatprep.subr.bf16.mxu0 %v601
    %796 = vmatpush1.bf16.msra.mxu0 %v600
    %797 = vmatprep.subr.bf16.mxu0 %v604
    %798 = vmatpush1.bf16.msra.mxu0 %v603
    %799 = vmatprep.subr.bf16.mxu0 %v607
    %800 = vmatpush1.bf16.msra.mxu0 %v606
    %801 = vmatprep.subr.bf16.mxu0 %v610
    %802 = vmatpush1.bf16.msra.mxu0 %v609
    %803 = vmatprep.subr.bf16.mxu0 %v613
    %804 = vmatpush1.bf16.msra.mxu0 %v612
    %805 = vmatprep.subr.bf16.mxu0 %v616
    %806 = vmatpush1.bf16.msra.mxu0 %v615
    %807 = vmatprep.mubr.bf16.mxu0 %v223
    %808 = vmatmul.mubr.bf16.gmra.mrb[0].mxu0 %v222
    %v809 = vpop.f32.mrb[0].mxu0
    %v810 = vadd.f32 0.0, %v809
    %v811 = vpop.f32.mrb[0].mxu0
    %v812 = vadd.f32 0.0, %v811
    %v813 = vpop.f32.mrb[0].mxu0
    %v814 = vadd.f32 0.0, %v813
    %v815 = vpop.f32.mrb[0].mxu0
    %v816 = vadd.f32 0.0, %v815
    %817 = vmatprep.mubr.bf16.mxu0 %v228
    %818 = vmatmul.mubr.bf16.gmra.mrb[0].mxu0 %v227
    %v819 = vpop.f32.mrb[0].mxu0
    %v820 = vadd.f32 0.0, %v819
    %v821 = vpop.f32.mrb[0].mxu0
    %v822 = vadd.f32 0.0, %v821
    %v823 = vpop.f32.mrb[0].mxu0
    %v824 = vadd.f32 0.0, %v823
    %v825 = vpop.f32.mrb[0].mxu0
    %v826 = vadd.f32 0.0, %v825
    %827 = vdwg.mxu0
    %828 = vmatprep.subr.bf16.mxu0 %v619
    %829 = vmatpush1.bf16.msra.mxu0 %v618
    %830 = vmatprep.subr.bf16.mxu0 %v622
    %831 = vmatpush1.bf16.msra.mxu0 %v621
    %832 = vmatprep.subr.bf16.mxu0 %v625
    %833 = vmatpush1.bf16.msra.mxu0 %v624
    %834 = vmatprep.subr.bf16.mxu0 %v628
    %835 = vmatpush1.bf16.msra.mxu0 %v627
    %836 = vmatprep.subr.bf16.mxu0 %v631
    %837 = vmatpush1.bf16.msra.mxu0 %v630
    %838 = vmatprep.subr.bf16.mxu0 %v634
    %839 = vmatpush1.bf16.msra.mxu0 %v633
    %840 = vmatprep.subr.bf16.mxu0 %v637
    %841 = vmatpush1.bf16.msra.mxu0 %v636
    %842 = vmatprep.subr.bf16.mxu0 %v640
    %843 = vmatpush1.bf16.msra.mxu0 %v639
    %844 = vmatprep.subr.bf16.mxu0 %v643
    %845 = vmatpush1.bf16.msra.mxu0 %v642
    %846 = vmatprep.subr.bf16.mxu0 %v646
    %847 = vmatpush1.bf16.msra.mxu0 %v645
    %848 = vmatprep.subr.bf16.mxu0 %v649
    %849 = vmatpush1.bf16.msra.mxu0 %v648
    %850 = vmatprep.subr.bf16.mxu0 %v652
    %851 = vmatpush1.bf16.msra.mxu0 %v651
    %852 = vmatprep.subr.bf16.mxu0 %v655
    %853 = vmatpush1.bf16.msra.mxu0 %v654
    %854 = vmatprep.subr.bf16.mxu0 %v658
    %855 = vmatpush1.bf16.msra.mxu0 %v657
    %856 = vmatprep.subr.bf16.mxu0 %v661
    %857 = vmatpush1.bf16.msra.mxu0 %v660
    %858 = vmatprep.subr.bf16.mxu0 %v664
    %859 = vmatpush1.bf16.msra.mxu0 %v663
    %860 = vmatprep.mubr.bf16.mxu0 %v225
    %861 = vmatmul.mubr.bf16.gmra.mrb[0].mxu0 %v224
    %v862 = vpop.f32.mrb[0].mxu0
    %v863 = vadd.f32 %v810, %v862
    %v864 = vpop.f32.mrb[0].mxu0
    %v865 = vadd.f32 %v812, %v864
    %v866 = vpop.f32.mrb[0].mxu0
    %v867 = vadd.f32 %v814, %v866
    %v868 = vpop.f32.mrb[0].mxu0
    %v869 = vadd.f32 %v816, %v868
    %870 = vmatprep.mubr.bf16.mxu0 %v230
    %871 = vmatmul.mubr.bf16.gmra.mrb[0].mxu0 %v229
    %v872 = vpop.f32.mrb[0].mxu0
    %v873 = vadd.f32 %v820, %v872
    %v874 = vpop.f32.mrb[0].mxu0
    %v875 = vadd.f32 %v822, %v874
    %v876 = vpop.f32.mrb[0].mxu0
    %v877 = vadd.f32 %v824, %v876
    %v878 = vpop.f32.mrb[0].mxu0
    %v879 = vadd.f32 %v826, %v878
    %880 = vdwg.mxu0
    %881 = vmatprep.subr.bf16.mxu0 %v667
    %882 = vmatpush1.bf16.msra.mxu0 %v666
    %883 = vmatprep.subr.bf16.mxu0 0
    %884 = vmatpush1.bf16.msra.mxu0 0
    %885 = vmatprep.subr.bf16.mxu0 0
    %886 = vmatpush1.bf16.msra.mxu0 0
    %887 = vmatprep.subr.bf16.mxu0 0
    %888 = vmatpush1.bf16.msra.mxu0 0
    %889 = vmatprep.subr.bf16.mxu0 0
    %890 = vmatpush1.bf16.msra.mxu0 0
    %891 = vmatprep.subr.bf16.mxu0 0
    %892 = vmatpush1.bf16.msra.mxu0 0
    %893 = vmatprep.subr.bf16.mxu0 0
    %894 = vmatpush1.bf16.msra.mxu0 0
    %895 = vmatprep.subr.bf16.mxu0 0
    %896 = vmatpush1.bf16.msra.mxu0 0
    %897 = vmatprep.subr.bf16.mxu0 0
    %898 = vmatpush1.bf16.msra.mxu0 0
    %899 = vmatprep.subr.bf16.mxu0 0
    %900 = vmatpush1.bf16.msra.mxu0 0
    %901 = vmatprep.subr.bf16.mxu0 0
    %902 = vmatpush1.bf16.msra.mxu0 0
    %903 = vmatprep.subr.bf16.mxu0 0
    %904 = vmatpush1.bf16.msra.mxu0 0
    %905 = vmatprep.subr.bf16.mxu0 0
    %906 = vmatpush1.bf16.msra.mxu0 0
    %907 = vmatprep.subr.bf16.mxu0 0
    %908 = vmatpush1.bf16.msra.mxu0 0
    %909 = vmatprep.subr.bf16.mxu0 0
    %910 = vmatpush1.bf16.msra.mxu0 0
    %911 = vmatprep.subr.bf16.mxu0 0
    %912 = vmatpush1.bf16.msra.mxu0 0
    %913 = vmatprep.mubr.bf16.mxu0 0
    %914 = vmatmul.mubr.bf16.gmra.mrb[0].mxu0 %v770
    %v915 = vpop.f32.mrb[0].mxu0
    %v916 = vadd.f32 %v863, %v915
    %v917 = vpop.f32.mrb[0].mxu0
    %v918 = vadd.f32 %v865, %v917
    %v919 = vpop.f32.mrb[0].mxu0
    %v920 = vadd.f32 %v867, %v919
    %v921 = vpop.f32.mrb[0].mxu0
    %v922 = vadd.f32 %v869, %v921
    %923 = vmatprep.mubr.bf16.mxu0 0
    %924 = vmatmul.mubr.bf16.gmra.mrb[0].mxu0 %v773
    %v925 = vpop.f32.mrb[0].mxu0
    %v926 = vadd.f32 %v873, %v925
    %v927 = vpop.f32.mrb[0].mxu0
    %v928 = vadd.f32 %v875, %v927
    %v929 = vpop.f32.mrb[0].mxu0
    %v930 = vadd.f32 %v877, %v929
    %v931 = vpop.f32.mrb[0].mxu0
    %v932 = vadd.f32 %v879, %v931
    %933 = vdwg.mxu0
    %934 = vmatprep.subr.bf16.mxu0 0
    %935 = vmatpush1.bf16.msra.mxu0 %v572
    %936 = vmatprep.subr.bf16.mxu0 0
    %937 = vmatpush1.bf16.msra.mxu0 %v575
    %938 = vmatprep.subr.bf16.mxu0 0
    %939 = vmatpush1.bf16.msra.mxu0 %v578
    %940 = vmatprep.subr.bf16.mxu0 0
    %941 = vmatpush1.bf16.msra.mxu0 %v581
    %942 = vmatprep.subr.bf16.mxu0 0
    %943 = vmatpush1.bf16.msra.mxu0 %v584
    %944 = vmatprep.subr.bf16.mxu0 0
    %945 = vmatpush1.bf16.msra.mxu0 %v587
    %946 = vmatprep.subr.bf16.mxu0 0
    %947 = vmatpush1.bf16.msra.mxu0 %v590
    %948 = vmatprep.subr.bf16.mxu0 0
    %949 = vmatpush1.bf16.msra.mxu0 %v593
    %950 = vmatprep.subr.bf16.mxu0 0
    %951 = vmatpush1.bf16.msra.mxu0 %v596
    %952 = vmatprep.subr.bf16.mxu0 0
    %953 = vmatpush1.bf16.msra.mxu0 %v599
    %954 = vmatprep.subr.bf16.mxu0 0
    %955 = vmatpush1.bf16.msra.mxu0 %v602
    %956 = vmatprep.subr.bf16.mxu0 0
    %957 = vmatpush1.bf16.msra.mxu0 %v605
    %958 = vmatprep.subr.bf16.mxu0 0
    %959 = vmatpush1.bf16.msra.mxu0 %v608
    %960 = vmatprep.subr.bf16.mxu0 0
    %961 = vmatpush1.bf16.msra.mxu0 %v611
    %962 = vmatprep.subr.bf16.mxu0 0
    %963 = vmatpush1.bf16.msra.mxu0 %v614
    %964 = vmatprep.subr.bf16.mxu0 0
    %965 = vmatpush1.bf16.msra.mxu0 %v617
    %966 = vmatprep.mubr.bf16.mxu0 %v223
    %967 = vmatmul.mubr.bf16.gmra.mrb[0].mxu0 %v222
    %v968 = vpop.f32.mrb[0].mxu0
    %v969 = vadd.f32 0.0, %v968
    %v970 = vpop.f32.mrb[0].mxu0
    %v971 = vpop.f32.mrb[0].mxu0
    %v972 = vadd.f32 0.0, %v971
    %v973 = vpop.f32.mrb[0].mxu0
    %974 = vmatprep.mubr.bf16.mxu0 %v228
    %975 = vmatmul.mubr.bf16.gmra.mrb[0].mxu0 %v227
    %v976 = vpop.f32.mrb[0].mxu0
    %v977 = vadd.f32 0.0, %v976
    %v978 = vpop.f32.mrb[0].mxu0
    %v979 = vpop.f32.mrb[0].mxu0
    %v980 = vadd.f32 0.0, %v979
    %v981 = vpop.f32.mrb[0].mxu0
    %982 = vdwg.mxu0
    %983 = vmatprep.subr.bf16.mxu0 0
    %984 = vmatpush1.bf16.msra.mxu0 %v620
    %985 = vmatprep.subr.bf16.mxu0 0
    %986 = vmatpush1.bf16.msra.mxu0 %v623
    %987 = vmatprep.subr.bf16.mxu0 0
    %988 = vmatpush1.bf16.msra.mxu0 %v626
    %989 = vmatprep.subr.bf16.mxu0 0
    %990 = vmatpush1.bf16.msra.mxu0 %v629
    %991 = vmatprep.subr.bf16.mxu0 0
    %992 = vmatpush1.bf16.msra.mxu0 %v632
    %993 = vmatprep.subr.bf16.mxu0 0
    %994 = vmatpush1.bf16.msra.mxu0 %v635
    %995 = vmatprep.subr.bf16.mxu0 0
    %996 = vmatpush1.bf16.msra.mxu0 %v638
    %997 = vmatprep.subr.bf16.mxu0 0
    %998 = vmatpush1.bf16.msra.mxu0 %v641
    %999 = vmatprep.subr.bf16.mxu0 0
    %1000 = vmatpush1.bf16.msra.mxu0 %v644
    %1001 = vmatprep.subr.bf16.mxu0 0
    %1002 = vmatpush1.bf16.msra.mxu0 %v647
    %1003 = vmatprep.subr.bf16.mxu0 0
    %1004 = vmatpush1.bf16.msra.mxu0 %v650
    %1005 = vmatprep.subr.bf16.mxu0 0
    %1006 = vmatpush1.bf16.msra.mxu0 %v653
    %1007 = vmatprep.subr.bf16.mxu0 0
    %1008 = vmatpush1.bf16.msra.mxu0 %v656
    %1009 = vmatprep.subr.bf16.mxu0 0
    %1010 = vmatpush1.bf16.msra.mxu0 %v659
    %1011 = vmatprep.subr.bf16.mxu0 0
    %1012 = vmatpush1.bf16.msra.mxu0 %v662
    %1013 = vmatprep.subr.bf16.mxu0 0
    %1014 = vmatpush1.bf16.msra.mxu0 %v665
    %1015 = vmatprep.mubr.bf16.mxu0 %v225
    %1016 = vmatmul.mubr.bf16.gmra.mrb[0].mxu0 %v224
    %v1017 = vpop.f32.mrb[0].mxu0
    %v1018 = vadd.f32 %v969, %v1017
    %v1019 = vpop.f32.mrb[0].mxu0
    %v1020 = vpop.f32.mrb[0].mxu0
    %v1021 = vadd.f32 %v972, %v1020
    %v1022 = vpop.f32.mrb[0].mxu0
    %1023 = vmatprep.mubr.bf16.mxu0 %v230
    %1024 = vmatmul.mubr.bf16.gmra.mrb[0].mxu0 %v229
    %v1025 = vpop.f32.mrb[0].mxu0
    %v1026 = vadd.f32 %v977, %v1025
    %v1027 = vpop.f32.mrb[0].mxu0
    %v1028 = vpop.f32.mrb[0].mxu0
    %v1029 = vadd.f32 %v980, %v1028
    %v1030 = vpop.f32.mrb[0].mxu0
    %1031 = vdwg.mxu0
    %1032 = vmatprep.subr.bf16.mxu0 0
    %1033 = vmatpush1.bf16.msra.mxu0 %v668
    %1034 = vmatprep.subr.bf16.mxu0 0
    %1035 = vmatpush1.bf16.msra.mxu0 0
    %1036 = vmatprep.subr.bf16.mxu0 0
    %1037 = vmatpush1.bf16.msra.mxu0 0
    %1038 = vmatprep.subr.bf16.mxu0 0
    %1039 = vmatpush1.bf16.msra.mxu0 0
    %1040 = vmatprep.subr.bf16.mxu0 0
    %1041 = vmatpush1.bf16.msra.mxu0 0
    %1042 = vmatprep.subr.bf16.mxu0 0
    %1043 = vmatpush1.bf16.msra.mxu0 0
    %1044 = vmatprep.subr.bf16.mxu0 0
    %1045 = vmatpush1.bf16.msra.mxu0 0
    %1046 = vmatprep.subr.bf16.mxu0 0
    %1047 = vmatpush1.bf16.msra.mxu0 0
    %1048 = vmatprep.subr.bf16.mxu0 0
    %1049 = vmatpush1.bf16.msra.mxu0 0
    %1050 = vmatprep.subr.bf16.mxu0 0
    %1051 = vmatpush1.bf16.msra.mxu0 0
    %1052 = vmatprep.subr.bf16.mxu0 0
    %1053 = vmatpush1.bf16.msra.mxu0 0
    %1054 = vmatprep.subr.bf16.mxu0 0
    %1055 = vmatpush1.bf16.msra.mxu0 0
    %1056 = vmatprep.subr.bf16.mxu0 0
    %1057 = vmatpush1.bf16.msra.mxu0 0
    %1058 = vmatprep.subr.bf16.mxu0 0
    %1059 = vmatpush1.bf16.msra.mxu0 0
    %1060 = vmatprep.subr.bf16.mxu0 0
    %1061 = vmatpush1.bf16.msra.mxu0 0
    %1062 = vmatprep.subr.bf16.mxu0 0
    %1063 = vmatpush1.bf16.msra.mxu0 0
    %1064 = vmatprep.mubr.bf16.mxu0 0
    %1065 = vmatmul.mubr.bf16.gmra.mrb[0].mxu0 %v770
    %v1066 = vpop.f32.mrb[0].mxu0
    %v1067 = vadd.f32 %v1018, %v1066
    %v1068 = vpop.f32.mrb[0].mxu0
    %v1069 = vpop.f32.mrb[0].mxu0
    %v1070 = vadd.f32 %v1021, %v1069
    %v1071 = vpop.f32.mrb[0].mxu0
    %1072 = vmatprep.mubr.bf16.mxu0 0
    %1073 = vmatmul.mubr.bf16.gmra.mrb[0].mxu0 %v773
    %v1074 = vpop.f32.mrb[0].mxu0
    %v1075 = vadd.f32 %v1026, %v1074
    %v1076 = vpop.f32.mrb[0].mxu0
    %v1077 = vpop.f32.mrb[0].mxu0
    %v1078 = vadd.f32 %v1029, %v1077
    %v1079 = vpop.f32.mrb[0].mxu0
    %1080 = vdwg.mxu0
    %v1081 = vld [vmem:[%s1] sm:$0xff]
    %v1082 = vld [vmem:[%s1 + $0x8] sm:$0xff]
    %v1083 = vld [vmem:[%s1 + $0x10] sm:$0xf]
    %v1084 = vld [vmem:[%s1 + $0x14] sm:$0xff]
    %v1085 = vld [vmem:[%s1 + $0x1c] sm:$0xff]
    %v1086 = vld [vmem:[%s1 + $0x24] sm:$0xf]
    %v1087 = vld [vmem:[%s1 + $0x28] sm:$0xff]
    %v1088 = vld [vmem:[%s1 + $0x30] sm:$0xff]
    %v1089 = vld [vmem:[%s1 + $0x38] sm:$0xf]
    %v1090 = vld [vmem:[%s1 + $0x3c] sm:$0xff]
    %v1091 = vld [vmem:[%s1 + $0x44] sm:$0xff]
    %v1092 = vld [vmem:[%s1 + $0x4c] sm:$0xf]
    %v1093 = vld [vmem:[#allocation4] sm:$0xff]
    %v1094 = vld [vmem:[#allocation4 + $0x8] sm:$0xf]
    %v1095 = vld [vmem:[#allocation4 + $0xc] sm:$0xff]
    %v1096 = vld [vmem:[#allocation4 + $0x14] sm:$0xf]
    %v1097 = vld [vmem:[#allocation4 + $0x18] sm:$0xff]
    %v1098 = vld [vmem:[#allocation4 + $0x20] sm:$0xf]
    %v1099 = vld [vmem:[#allocation4 + $0x24] sm:$0xff]
    %v1100 = vld [vmem:[#allocation4 + $0x2c] sm:$0xf]
    %v1101 = vld [vmem:[#allocation4 + $0x30] sm:$0xff]
    %v1102 = vld [vmem:[#allocation4 + $0x38] sm:$0xf]
    %v1103 = vld [vmem:[#allocation4 + $0x3c] sm:$0xff]
    %v1104 = vld [vmem:[#allocation4 + $0x44] sm:$0xf]
    %v1105 = vld [vmem:[#allocation4 + $0x48] sm:$0xff]
    %v1106 = vld [vmem:[#allocation4 + $0x50] sm:$0xf]
    %v1107 = vld [vmem:[#allocation4 + $0x54] sm:$0xff]
    %v1108 = vld [vmem:[#allocation4 + $0x5c] sm:$0xf]
    %v1109 = vld [vmem:[#allocation4 + $0x60] sm:$0xff]
    %v1110 = vld [vmem:[#allocation4 + $0x68] sm:$0xf]
    %v1111 = vld [vmem:[#allocation4 + $0x6c] sm:$0xff]
    %v1112 = vld [vmem:[#allocation4 + $0x74] sm:$0xf]
    %v1113 = vld [vmem:[#allocation4 + $0x78] sm:$0xff]
    %v1114 = vld [vmem:[#allocation4 + $0x80] sm:$0xf]
    %v1115 = vld [vmem:[#allocation4 + $0x84] sm:$0xff]
    %v1116 = vld [vmem:[#allocation4 + $0x8c] sm:$0xf]
    %v1117 = vld [vmem:[#allocation4 + $0x90] sm:$0xff]
    %v1118 = vld [vmem:[#allocation4 + $0x98] sm:$0xf]
    %v1119 = vld [vmem:[#allocation4 + $0x9c] sm:$0xff]
    %v1120 = vld [vmem:[#allocation4 + $0xa4] sm:$0xf]
    %v1121 = vld [vmem:[#allocation4 + $0xa8] sm:$0xff]
    %v1122 = vld [vmem:[#allocation4 + $0xb0] sm:$0xf]
    %v1123 = vld [vmem:[#allocation4 + $0xb4] sm:$0xff]
    %v1124 = vld [vmem:[#allocation4 + $0xbc] sm:$0xf]
    %v1125 = vld [vmem:[#allocation4 + $0xc0] sm:$0xff]
    %v1126 = vld [vmem:[#allocation4 + $0xc8] sm:$0xf]
    %v1127 = vld [vmem:[#allocation4 + $0xcc] sm:$0xff]
    %v1128 = vld [vmem:[#allocation4 + $0xd4] sm:$0xf]
    %v1129 = vld [vmem:[#allocation4 + $0xd8] sm:$0xff]
    %v1130 = vld [vmem:[#allocation4 + $0xe0] sm:$0xf]
    %v1131 = vld [vmem:[#allocation4 + $0xe4] sm:$0xff]
    %v1132 = vld [vmem:[#allocation4 + $0xec] sm:$0xf]
    %v1133 = vld [vmem:[#allocation4 + $0xf0] sm:$0xff]
    %v1134 = vld [vmem:[#allocation4 + $0xf8] sm:$0xf]
    %v1135 = vld [vmem:[#allocation4 + $0xfc] sm:$0xff]
    %v1136 = vld [vmem:[#allocation4 + $0x104] sm:$0xf]
    %v1137 = vld [vmem:[#allocation4 + $0x108] sm:$0xff]
    %v1138 = vld [vmem:[#allocation4 + $0x110] sm:$0xf]
    %v1139 = vld [vmem:[#allocation4 + $0x114] sm:$0xff]
    %v1140 = vld [vmem:[#allocation4 + $0x11c] sm:$0xf]
    %v1141 = vld [vmem:[#allocation4 + $0x120] sm:$0xff]
    %v1142 = vld [vmem:[#allocation4 + $0x128] sm:$0xf]
    %v1143 = vld [vmem:[#allocation4 + $0x12c] sm:$0xff]
    %v1144 = vld [vmem:[#allocation4 + $0x134] sm:$0xf]
    %v1145 = vld [vmem:[#allocation4 + $0x138] sm:$0xff]
    %v1146 = vld [vmem:[#allocation4 + $0x140] sm:$0xf]
    %v1147 = vld [vmem:[#allocation4 + $0x144] sm:$0xff]
    %v1148 = vld [vmem:[#allocation4 + $0x14c] sm:$0xf]
    %v1149 = vld [vmem:[#allocation4 + $0x150] sm:$0xff]
    %v1150 = vld [vmem:[#allocation4 + $0x158] sm:$0xf]
    %v1151 = vld [vmem:[#allocation4 + $0x15c] sm:$0xff]
    %v1152 = vld [vmem:[#allocation4 + $0x164] sm:$0xf]
    %v1153 = vld [vmem:[#allocation4 + $0x168] sm:$0xff]
    %v1154 = vld [vmem:[#allocation4 + $0x170] sm:$0xf]
    %v1155 = vld [vmem:[#allocation4 + $0x174] sm:$0xff]
    %v1156 = vld [vmem:[#allocation4 + $0x17c] sm:$0xf]
    %v1157 = vld [vmem:[#allocation4 + $0x180] sm:$0xff]
    %v1158 = vld [vmem:[#allocation4 + $0x188] sm:$0xf]
    %v1159 = vld [vmem:[#allocation4 + $0x18c] sm:$0xff]
    %v1160 = vld [vmem:[#allocation4 + $0x194] sm:$0xf]
    %v1161 = vld [vmem:[#allocation4 + $0x198] sm:$0xff]
    %v1162 = vld [vmem:[#allocation4 + $0x1a0] sm:$0xf]
    %v1163 = vld [vmem:[#allocation4 + $0x1a4] sm:$0xff]
    %v1164 = vld [vmem:[#allocation4 + $0x1ac] sm:$0xf]
    %v1165 = vld [vmem:[#allocation4 + $0x1b0] sm:$0xff]
    %v1166 = vld [vmem:[#allocation4 + $0x1b8] sm:$0xf]
    %v1167 = vld [vmem:[#allocation4 + $0x1bc] sm:$0xff]
    %v1168 = vld [vmem:[#allocation4 + $0x1c4] sm:$0xf]
    %v1169 = vld [vmem:[#allocation4 + $0x1c8] sm:$0xff]
    %v1170 = vld [vmem:[#allocation4 + $0x1d0] sm:$0xf]
    %v1171 = vld [vmem:[#allocation4 + $0x1d4] sm:$0xff]
    %v1172 = vld [vmem:[#allocation4 + $0x1dc] sm:$0xf]
    %v1173 = vld [vmem:[#allocation4 + $0x1e0] sm:$0xff]
    %v1174 = vld [vmem:[#allocation4 + $0x1e8] sm:$0xf]
    %v1175 = vld [vmem:[#allocation4 + $0x1ec] sm:$0xff]
    %v1176 = vld [vmem:[#allocation4 + $0x1f4] sm:$0xf]
    %v1177 = vld [vmem:[#allocation4 + $0x1f8] sm:$0xff]
    %v1178 = vld [vmem:[#allocation4 + $0x200] sm:$0xf]
    %v1179 = vld [vmem:[#allocation4 + $0x204] sm:$0xff]
    %v1180 = vld [vmem:[#allocation4 + $0x20c] sm:$0xf]
    %v1181 = vld [vmem:[#allocation4 + $0x210] sm:$0xff]
    %v1182 = vld [vmem:[#allocation4 + $0x218] sm:$0xf]
    %v1183 = vld [vmem:[#allocation4 + $0x21c] sm:$0xff]
    %v1184 = vld [vmem:[#allocation4 + $0x224] sm:$0xf]
    %v1185 = vld [vmem:[#allocation4 + $0x228] sm:$0xff]
    %v1186 = vld [vmem:[#allocation4 + $0x230] sm:$0xf]
    %v1187 = vld [vmem:[#allocation4 + $0x234] sm:$0xff]
    %v1188 = vld [vmem:[#allocation4 + $0x23c] sm:$0xf]
    %v1189 = vld [vmem:[#allocation4 + $0x240] sm:$0xff]
    %v1190 = vld [vmem:[#allocation4 + $0x248] sm:$0xf]
    %v1191 = vld [vmem:[#allocation4 + $0x24c] sm:$0xff]
    %v1192 = vld [vmem:[#allocation4 + $0x254] sm:$0xf]
    %v1193 = vld [vmem:[#allocation4 + $0x258] sm:$0xff]
    %v1194 = vld [vmem:[#allocation4 + $0x260] sm:$0xf]
    %v1195 = vld [vmem:[#allocation4 + $0x264] sm:$0xff]
    %v1196 = vld [vmem:[#allocation4 + $0x26c] sm:$0xf]
    %v1197 = vld [vmem:[#allocation4 + $0x270] sm:$0xff]
    %v1198 = vld [vmem:[#allocation4 + $0x278] sm:$0xf]
    %v1199 = vld [vmem:[#allocation4 + $0x27c] sm:$0xff]
    %v1200 = vld [vmem:[#allocation4 + $0x284] sm:$0xf]
    %v1201 = vld [vmem:[#allocation4 + $0x288] sm:$0xff]
    %v1202 = vld [vmem:[#allocation4 + $0x290] sm:$0xf]
    %v1203 = vld [vmem:[#allocation4 + $0x294] sm:$0xff]
    %v1204 = vld [vmem:[#allocation4 + $0x29c] sm:$0xf]
    %v1205 = vld [vmem:[#allocation4 + $0x2a0] sm:$0xff]
    %v1206 = vld [vmem:[#allocation4 + $0x2a8] sm:$0xf]
    %v1207 = vld [vmem:[#allocation4 + $0x2ac] sm:$0xff]
    %v1208 = vld [vmem:[#allocation4 + $0x2b4] sm:$0xf]
    %v1209 = vld [vmem:[#allocation4 + $0x2b8] sm:$0xff]
    %v1210 = vld [vmem:[#allocation4 + $0x2c0] sm:$0xf]
    %v1211 = vld [vmem:[#allocation4 + $0x2c4] sm:$0xff]
    %v1212 = vld [vmem:[#allocation4 + $0x2cc] sm:$0xf]
    %v1213 = vld [vmem:[#allocation4 + $0x2d0] sm:$0xff]
    %v1214 = vld [vmem:[#allocation4 + $0x2d8] sm:$0xf]
    %v1215 = vld [vmem:[#allocation4 + $0x2dc] sm:$0xff]
    %v1216 = vld [vmem:[#allocation4 + $0x2e4] sm:$0xf]
    %v1217 = vld [vmem:[#allocation4 + $0x2e8] sm:$0xff]
    %v1218 = vld [vmem:[#allocation4 + $0x2f0] sm:$0xf]
    %v1219 = vld [vmem:[#allocation4 + $0x2f4] sm:$0xff]
    %v1220 = vld [vmem:[#allocation4 + $0x2fc] sm:$0xf]
    %v1221 = vld [vmem:[#allocation4 + $0x300] sm:$0xff]
    %v1222 = vld [vmem:[#allocation4 + $0x308] sm:$0xf]
    %v1223 = vld [vmem:[#allocation4 + $0x30c] sm:$0xff]
    %v1224 = vld [vmem:[#allocation4 + $0x314] sm:$0xf]
    %v1237 = vunpack.c.l.b16 %v1081
    %v1238 = vunpack.c.h.b16 %v1081
    %v1239 = vunpack.c.l.b16 %v1082
    %v1240 = vunpack.c.h.b16 %v1082
    %v1241 = vunpack.c.l.b16 %v1083
    %v1242 = vunpack.c.l.b16 %v1084
    %v1243 = vunpack.c.h.b16 %v1084
    %v1244 = vunpack.c.l.b16 %v1085
    %v1245 = vunpack.c.h.b16 %v1085
    %v1246 = vunpack.c.l.b16 %v1086
    %v1247 = vunpack.c.l.b16 %v1087
    %v1248 = vunpack.c.h.b16 %v1087
    %v1249 = vunpack.c.l.b16 %v1088
    %v1250 = vunpack.c.h.b16 %v1088
    %v1251 = vunpack.c.l.b16 %v1089
    %v1252 = vunpack.c.l.b16 %v1090
    %v1253 = vunpack.c.h.b16 %v1090
    %v1254 = vunpack.c.l.b16 %v1091
    %v1255 = vunpack.c.h.b16 %v1091
    %v1256 = vunpack.c.l.b16 %v1092
    %v1257 = vpack.c.b16 %v1242, %v1237
    %v1258 = vpack.c.b16 %v1243, %v1238
    %v1259 = vpack.c.b16 %v1244, %v1239
    %v1260 = vpack.c.b16 %v1245, %v1240
    %v1261 = vpack.c.b16 %v1246, %v1241
    %v1262 = vpack.c.b16 %v1252, %v1247
    %v1263 = vpack.c.b16 %v1253, %v1248
    %v1264 = vpack.c.b16 %v1254, %v1249
    %v1265 = vpack.c.b16 %v1255, %v1250
    %v1266 = vpack.c.b16 %v1256, %v1251
    %v1407 = vunpack.c.l.b16 %v1093
    %v1408 = vunpack.c.h.b16 %v1093
    %v1409 = vunpack.c.l.b16 %v1094
    %v1410 = vunpack.c.l.b16 %v1095
    %v1411 = vunpack.c.h.b16 %v1095
    %v1412 = vunpack.c.l.b16 %v1096
    %v1413 = vunpack.c.l.b16 %v1097
    %v1414 = vunpack.c.h.b16 %v1097
    %v1415 = vunpack.c.l.b16 %v1098
    %v1416 = vunpack.c.l.b16 %v1099
    %v1417 = vunpack.c.h.b16 %v1099
    %v1418 = vunpack.c.l.b16 %v1100
    %v1419 = vunpack.c.l.b16 %v1101
    %v1420 = vunpack.c.h.b16 %v1101
    %v1421 = vunpack.c.l.b16 %v1102
    %v1422 = vunpack.c.l.b16 %v1103
    %v1423 = vunpack.c.h.b16 %v1103
    %v1424 = vunpack.c.l.b16 %v1104
    %v1425 = vunpack.c.l.b16 %v1105
    %v1426 = vunpack.c.h.b16 %v1105
    %v1427 = vunpack.c.l.b16 %v1106
    %v1428 = vunpack.c.l.b16 %v1107
    %v1429 = vunpack.c.h.b16 %v1107
    %v1430 = vunpack.c.l.b16 %v1108
    %v1431 = vunpack.c.l.b16 %v1109
    %v1432 = vunpack.c.h.b16 %v1109
    %v1433 = vunpack.c.l.b16 %v1110
    %v1434 = vunpack.c.l.b16 %v1111
    %v1435 = vunpack.c.h.b16 %v1111
    %v1436 = vunpack.c.l.b16 %v1112
    %v1437 = vunpack.c.l.b16 %v1113
    %v1438 = vunpack.c.h.b16 %v1113
    %v1439 = vunpack.c.l.b16 %v1114
    %v1440 = vunpack.c.l.b16 %v1115
    %v1441 = vunpack.c.h.b16 %v1115
    %v1442 = vunpack.c.l.b16 %v1116
    %v1443 = vunpack.c.l.b16 %v1117
    %v1444 = vunpack.c.h.b16 %v1117
    %v1445 = vunpack.c.l.b16 %v1118
    %v1446 = vunpack.c.l.b16 %v1119
    %v1447 = vunpack.c.h.b16 %v1119
    %v1448 = vunpack.c.l.b16 %v1120
    %v1449 = vunpack.c.l.b16 %v1121
    %v1450 = vunpack.c.h.b16 %v1121
    %v1451 = vunpack.c.l.b16 %v1122
    %v1452 = vunpack.c.l.b16 %v1123
    %v1453 = vunpack.c.h.b16 %v1123
    %v1454 = vunpack.c.l.b16 %v1124
    %v1455 = vunpack.c.l.b16 %v1125
    %v1456 = vunpack.c.h.b16 %v1125
    %v1457 = vunpack.c.l.b16 %v1126
    %v1458 = vunpack.c.l.b16 %v1127
    %v1459 = vunpack.c.h.b16 %v1127
    %v1460 = vunpack.c.l.b16 %v1128
    %v1461 = vunpack.c.l.b16 %v1129
    %v1462 = vunpack.c.h.b16 %v1129
    %v1463 = vunpack.c.l.b16 %v1130
    %v1464 = vunpack.c.l.b16 %v1131
    %v1465 = vunpack.c.h.b16 %v1131
    %v1466 = vunpack.c.l.b16 %v1132
    %v1467 = vunpack.c.l.b16 %v1133
    %v1468 = vunpack.c.h.b16 %v1133
    %v1469 = vunpack.c.l.b16 %v1134
    %v1470 = vunpack.c.l.b16 %v1135
    %v1471 = vunpack.c.h.b16 %v1135
    %v1472 = vunpack.c.l.b16 %v1136
    %v1473 = vunpack.c.l.b16 %v1137
    %v1474 = vunpack.c.h.b16 %v1137
    %v1475 = vunpack.c.l.b16 %v1138
    %v1476 = vunpack.c.l.b16 %v1139
    %v1477 = vunpack.c.h.b16 %v1139
    %v1478 = vunpack.c.l.b16 %v1140
    %v1479 = vunpack.c.l.b16 %v1141
    %v1480 = vunpack.c.h.b16 %v1141
    %v1481 = vunpack.c.l.b16 %v1142
    %v1482 = vunpack.c.l.b16 %v1143
    %v1483 = vunpack.c.h.b16 %v1143
    %v1484 = vunpack.c.l.b16 %v1144
    %v1485 = vunpack.c.l.b16 %v1145
    %v1486 = vunpack.c.h.b16 %v1145
    %v1487 = vunpack.c.l.b16 %v1146
    %v1488 = vunpack.c.l.b16 %v1147
    %v1489 = vunpack.c.h.b16 %v1147
    %v1490 = vunpack.c.l.b16 %v1148
    %v1491 = vunpack.c.l.b16 %v1149
    %v1492 = vunpack.c.h.b16 %v1149
    %v1493 = vunpack.c.l.b16 %v1150
    %v1494 = vunpack.c.l.b16 %v1151
    %v1495 = vunpack.c.h.b16 %v1151
    %v1496 = vunpack.c.l.b16 %v1152
    %v1497 = vunpack.c.l.b16 %v1153
    %v1498 = vunpack.c.h.b16 %v1153
    %v1499 = vunpack.c.l.b16 %v1154
    %v1500 = vunpack.c.l.b16 %v1155
    %v1501 = vunpack.c.h.b16 %v1155
    %v1502 = vunpack.c.l.b16 %v1156
    %v1503 = vunpack.c.l.b16 %v1157
    %v1504 = vunpack.c.h.b16 %v1157
    %v1505 = vunpack.c.l.b16 %v1158
    %v1506 = vunpack.c.l.b16 %v1159
    %v1507 = vunpack.c.h.b16 %v1159
    %v1508 = vunpack.c.l.b16 %v1160
    %v1509 = vunpack.c.l.b16 %v1161
    %v1510 = vunpack.c.h.b16 %v1161
    %v1511 = vunpack.c.l.b16 %v1162
    %v1512 = vunpack.c.l.b16 %v1163
    %v1513 = vunpack.c.h.b16 %v1163
    %v1514 = vunpack.c.l.b16 %v1164
    %v1515 = vunpack.c.l.b16 %v1165
    %v1516 = vunpack.c.h.b16 %v1165
    %v1517 = vunpack.c.l.b16 %v1166
    %v1518 = vunpack.c.l.b16 %v1167
    %v1519 = vunpack.c.h.b16 %v1167
    %v1520 = vunpack.c.l.b16 %v1168
    %v1521 = vunpack.c.l.b16 %v1169
    %v1522 = vunpack.c.h.b16 %v1169
    %v1523 = vunpack.c.l.b16 %v1170
    %v1524 = vunpack.c.l.b16 %v1171
    %v1525 = vunpack.c.h.b16 %v1171
    %v1526 = vunpack.c.l.b16 %v1172
    %v1527 = vunpack.c.l.b16 %v1173
    %v1528 = vunpack.c.h.b16 %v1173
    %v1529 = vunpack.c.l.b16 %v1174
    %v1530 = vunpack.c.l.b16 %v1175
    %v1531 = vunpack.c.h.b16 %v1175
    %v1532 = vunpack.c.l.b16 %v1176
    %v1533 = vunpack.c.l.b16 %v1177
    %v1534 = vunpack.c.h.b16 %v1177
    %v1535 = vunpack.c.l.b16 %v1178
    %v1536 = vunpack.c.l.b16 %v1179
    %v1537 = vunpack.c.h.b16 %v1179
    %v1538 = vunpack.c.l.b16 %v1180
    %v1539 = vunpack.c.l.b16 %v1181
    %v1540 = vunpack.c.h.b16 %v1181
    %v1541 = vunpack.c.l.b16 %v1182
    %v1542 = vunpack.c.l.b16 %v1183
    %v1543 = vunpack.c.h.b16 %v1183
    %v1544 = vunpack.c.l.b16 %v1184
    %v1545 = vunpack.c.l.b16 %v1185
    %v1546 = vunpack.c.h.b16 %v1185
    %v1547 = vunpack.c.l.b16 %v1186
    %v1548 = vunpack.c.l.b16 %v1187
    %v1549 = vunpack.c.h.b16 %v1187
    %v1550 = vunpack.c.l.b16 %v1188
    %v1551 = vunpack.c.l.b16 %v1189
    %v1552 = vunpack.c.h.b16 %v1189
    %v1553 = vunpack.c.l.b16 %v1190
    %v1554 = vunpack.c.l.b16 %v1191
    %v1555 = vunpack.c.h.b16 %v1191
    %v1556 = vunpack.c.l.b16 %v1192
    %v1557 = vunpack.c.l.b16 %v1193
    %v1558 = vunpack.c.h.b16 %v1193
    %v1559 = vunpack.c.l.b16 %v1194
    %v1560 = vunpack.c.l.b16 %v1195
    %v1561 = vunpack.c.h.b16 %v1195
    %v1562 = vunpack.c.l.b16 %v1196
    %v1563 = vunpack.c.l.b16 %v1197
    %v1564 = vunpack.c.h.b16 %v1197
    %v1565 = vunpack.c.l.b16 %v1198
    %v1566 = vunpack.c.l.b16 %v1199
    %v1567 = vunpack.c.h.b16 %v1199
    %v1568 = vunpack.c.l.b16 %v1200
    %v1569 = vunpack.c.l.b16 %v1201
    %v1570 = vunpack.c.h.b16 %v1201
    %v1571 = vunpack.c.l.b16 %v1202
    %v1572 = vunpack.c.l.b16 %v1203
    %v1573 = vunpack.c.h.b16 %v1203
    %v1574 = vunpack.c.l.b16 %v1204
    %v1575 = vunpack.c.l.b16 %v1205
    %v1576 = vunpack.c.h.b16 %v1205
    %v1577 = vunpack.c.l.b16 %v1206
    %v1578 = vunpack.c.l.b16 %v1207
    %v1579 = vunpack.c.h.b16 %v1207
    %v1580 = vunpack.c.l.b16 %v1208
    %v1581 = vunpack.c.l.b16 %v1209
    %v1582 = vunpack.c.h.b16 %v1209
    %v1583 = vunpack.c.l.b16 %v1210
    %v1584 = vunpack.c.l.b16 %v1211
    %v1585 = vunpack.c.h.b16 %v1211
    %v1586 = vunpack.c.l.b16 %v1212
    %v1587 = vunpack.c.l.b16 %v1213
    %v1588 = vunpack.c.h.b16 %v1213
    %v1589 = vunpack.c.l.b16 %v1214
    %v1590 = vunpack.c.l.b16 %v1215
    %v1591 = vunpack.c.h.b16 %v1215
    %v1592 = vunpack.c.l.b16 %v1216
    %v1593 = vunpack.c.l.b16 %v1217
    %v1594 = vunpack.c.h.b16 %v1217
    %v1595 = vunpack.c.l.b16 %v1218
    %v1596 = vunpack.c.l.b16 %v1219
    %v1597 = vunpack.c.h.b16 %v1219
    %v1598 = vunpack.c.l.b16 %v1220
    %v1599 = vunpack.c.l.b16 %v1221
    %v1600 = vunpack.c.h.b16 %v1221
    %v1601 = vunpack.c.l.b16 %v1222
    %v1602 = vunpack.c.l.b16 %v1223
    %v1603 = vunpack.c.h.b16 %v1223
    %v1604 = vunpack.c.l.b16 %v1224
    %v1605 = vpack.c.b16 %v1410, %v1407
    %v1606 = vpack.c.b16 %v1411, %v1408
    %v1607 = vpack.c.b16 %v1412, %v1409
    %v1608 = vpack.c.b16 %v1416, %v1413
    %v1609 = vpack.c.b16 %v1417, %v1414
    %v1610 = vpack.c.b16 %v1418, %v1415
    %v1611 = vpack.c.b16 %v1422, %v1419
    %v1612 = vpack.c.b16 %v1423, %v1420
    %v1613 = vpack.c.b16 %v1424, %v1421
    %v1614 = vpack.c.b16 %v1428, %v1425
    %v1615 = vpack.c.b16 %v1429, %v1426
    %v1616 = vpack.c.b16 %v1430, %v1427
    %v1617 = vpack.c.b16 %v1434, %v1431
    %v1618 = vpack.c.b16 %v1435, %v1432
    %v1619 = vpack.c.b16 %v1436, %v1433
    %v1620 = vpack.c.b16 %v1440, %v1437
    %v1621 = vpack.c.b16 %v1441, %v1438
    %v1622 = vpack.c.b16 %v1442, %v1439
    %v1623 = vpack.c.b16 %v1446, %v1443
    %v1624 = vpack.c.b16 %v1447, %v1444
    %v1625 = vpack.c.b16 %v1448, %v1445
    %v1626 = vpack.c.b16 %v1452, %v1449
    %v1627 = vpack.c.b16 %v1453, %v1450
    %v1628 = vpack.c.b16 %v1454, %v1451
    %v1629 = vpack.c.b16 %v1458, %v1455
    %v1630 = vpack.c.b16 %v1459, %v1456
    %v1631 = vpack.c.b16 %v1460, %v1457
    %v1632 = vpack.c.b16 %v1464, %v1461
    %v1633 = vpack.c.b16 %v1465, %v1462
    %v1634 = vpack.c.b16 %v1466, %v1463
    %v1635 = vpack.c.b16 %v1470, %v1467
    %v1636 = vpack.c.b16 %v1471, %v1468
    %v1637 = vpack.c.b16 %v1472, %v1469
    %v1638 = vpack.c.b16 %v1476, %v1473
    %v1639 = vpack.c.b16 %v1477, %v1474
    %v1640 = vpack.c.b16 %v1478, %v1475
    %v1641 = vpack.c.b16 %v1482, %v1479
    %v1642 = vpack.c.b16 %v1483, %v1480
    %v1643 = vpack.c.b16 %v1484, %v1481
    %v1644 = vpack.c.b16 %v1488, %v1485
    %v1645 = vpack.c.b16 %v1489, %v1486
    %v1646 = vpack.c.b16 %v1490, %v1487
    %v1647 = vpack.c.b16 %v1494, %v1491
    %v1648 = vpack.c.b16 %v1495, %v1492
    %v1649 = vpack.c.b16 %v1496, %v1493
    %v1650 = vpack.c.b16 %v1500, %v1497
    %v1651 = vpack.c.b16 %v1501, %v1498
    %v1652 = vpack.c.b16 %v1502, %v1499
    %v1653 = vpack.c.b16 %v1506, %v1503
    %v1654 = vpack.c.b16 %v1507, %v1504
    %v1655 = vpack.c.b16 %v1508, %v1505
    %v1656 = vpack.c.b16 %v1512, %v1509
    %v1657 = vpack.c.b16 %v1513, %v1510
    %v1658 = vpack.c.b16 %v1514, %v1511
    %v1659 = vpack.c.b16 %v1518, %v1515
    %v1660 = vpack.c.b16 %v1519, %v1516
    %v1661 = vpack.c.b16 %v1520, %v1517
    %v1662 = vpack.c.b16 %v1524, %v1521
    %v1663 = vpack.c.b16 %v1525, %v1522
    %v1664 = vpack.c.b16 %v1526, %v1523
    %v1665 = vpack.c.b16 %v1530, %v1527
    %v1666 = vpack.c.b16 %v1531, %v1528
    %v1667 = vpack.c.b16 %v1532, %v1529
    %v1668 = vpack.c.b16 %v1536, %v1533
    %v1669 = vpack.c.b16 %v1537, %v1534
    %v1670 = vpack.c.b16 %v1538, %v1535
    %v1671 = vpack.c.b16 %v1542, %v1539
    %v1672 = vpack.c.b16 %v1543, %v1540
    %v1673 = vpack.c.b16 %v1544, %v1541
    %v1674 = vpack.c.b16 %v1548, %v1545
    %v1675 = vpack.c.b16 %v1549, %v1546
    %v1676 = vpack.c.b16 %v1550, %v1547
    %v1677 = vpack.c.b16 %v1554, %v1551
    %v1678 = vpack.c.b16 %v1555, %v1552
    %v1679 = vpack.c.b16 %v1556, %v1553
    %v1680 = vpack.c.b16 %v1560, %v1557
    %v1681 = vpack.c.b16 %v1561, %v1558
    %v1682 = vpack.c.b16 %v1562, %v1559
    %v1683 = vpack.c.b16 %v1566, %v1563
    %v1684 = vpack.c.b16 %v1567, %v1564
    %v1685 = vpack.c.b16 %v1568, %v1565
    %v1686 = vpack.c.b16 %v1572, %v1569
    %v1687 = vpack.c.b16 %v1573, %v1570
    %v1688 = vpack.c.b16 %v1574, %v1571
    %v1689 = vpack.c.b16 %v1578, %v1575
    %v1690 = vpack.c.b16 %v1579, %v1576
    %v1691 = vpack.c.b16 %v1580, %v1577
    %v1692 = vpack.c.b16 %v1584, %v1581
    %v1693 = vpack.c.b16 %v1585, %v1582
    %v1694 = vpack.c.b16 %v1586, %v1583
    %v1695 = vpack.c.b16 %v1590, %v1587
    %v1696 = vpack.c.b16 %v1591, %v1588
    %v1697 = vpack.c.b16 %v1592, %v1589
    %v1698 = vpack.c.b16 %v1596, %v1593
    %v1699 = vpack.c.b16 %v1597, %v1594
    %v1700 = vpack.c.b16 %v1598, %v1595
    %v1701 = vpack.c.b16 %v1602, %v1599
    %v1702 = vpack.c.b16 %v1603, %v1600
    %v1703 = vpack.c.b16 %v1604, %v1601
    %v1804 = vsel %vm768, %v1261, 0
    %v1807 = vsel %vm768, %v1266, 0
    %1809 = vmatprep.subr.bf16.mxu0 %v1606
    %1810 = vmatpush1.bf16.msra.mxu0 %v1605
    %1811 = vmatprep.subr.bf16.mxu0 %v1609
    %1812 = vmatpush1.bf16.msra.mxu0 %v1608
    %1813 = vmatprep.subr.bf16.mxu0 %v1612
    %1814 = vmatpush1.bf16.msra.mxu0 %v1611
    %1815 = vmatprep.subr.bf16.mxu0 %v1615
    %1816 = vmatpush1.bf16.msra.mxu0 %v1614
    %1817 = vmatprep.subr.bf16.mxu0 %v1618
    %1818 = vmatpush1.bf16.msra.mxu0 %v1617
    %1819 = vmatprep.subr.bf16.mxu0 %v1621
    %1820 = vmatpush1.bf16.msra.mxu0 %v1620
    %1821 = vmatprep.subr.bf16.mxu0 %v1624
    %1822 = vmatpush1.bf16.msra.mxu0 %v1623
    %1823 = vmatprep.subr.bf16.mxu0 %v1627
    %1824 = vmatpush1.bf16.msra.mxu0 %v1626
    %1825 = vmatprep.subr.bf16.mxu0 %v1630
    %1826 = vmatpush1.bf16.msra.mxu0 %v1629
    %1827 = vmatprep.subr.bf16.mxu0 %v1633
    %1828 = vmatpush1.bf16.msra.mxu0 %v1632
    %1829 = vmatprep.subr.bf16.mxu0 %v1636
    %1830 = vmatpush1.bf16.msra.mxu0 %v1635
    %1831 = vmatprep.subr.bf16.mxu0 %v1639
    %1832 = vmatpush1.bf16.msra.mxu0 %v1638
    %1833 = vmatprep.subr.bf16.mxu0 %v1642
    %1834 = vmatpush1.bf16.msra.mxu0 %v1641
    %1835 = vmatprep.subr.bf16.mxu0 %v1645
    %1836 = vmatpush1.bf16.msra.mxu0 %v1644
    %1837 = vmatprep.subr.bf16.mxu0 %v1648
    %1838 = vmatpush1.bf16.msra.mxu0 %v1647
    %1839 = vmatprep.subr.bf16.mxu0 %v1651
    %1840 = vmatpush1.bf16.msra.mxu0 %v1650
    %1841 = vmatprep.mubr.bf16.mxu0 %v1258
    %1842 = vmatmul.mubr.bf16.gmra.mrb[0].mxu0 %v1257
    %v1843 = vpop.f32.mrb[0].mxu0
    %v1844 = vadd.f32 0.0, %v1843
    %v1845 = vpop.f32.mrb[0].mxu0
    %v1846 = vadd.f32 0.0, %v1845
    %v1847 = vpop.f32.mrb[0].mxu0
    %v1848 = vadd.f32 0.0, %v1847
    %v1849 = vpop.f32.mrb[0].mxu0
    %v1850 = vadd.f32 0.0, %v1849
    %1851 = vmatprep.mubr.bf16.mxu0 %v1263
    %1852 = vmatmul.mubr.bf16.gmra.mrb[0].mxu0 %v1262
    %v1853 = vpop.f32.mrb[0].mxu0
    %v1854 = vadd.f32 0.0, %v1853
    %v1855 = vpop.f32.mrb[0].mxu0
    %v1856 = vadd.f32 0.0, %v1855
    %v1857 = vpop.f32.mrb[0].mxu0
    %v1858 = vadd.f32 0.0, %v1857
    %v1859 = vpop.f32.mrb[0].mxu0
    %v1860 = vadd.f32 0.0, %v1859
    %1861 = vdwg.mxu0
    %1862 = vmatprep.subr.bf16.mxu0 %v1654
    %1863 = vmatpush1.bf16.msra.mxu0 %v1653
    %1864 = vmatprep.subr.bf16.mxu0 %v1657
    %1865 = vmatpush1.bf16.msra.mxu0 %v1656
    %1866 = vmatprep.subr.bf16.mxu0 %v1660
    %1867 = vmatpush1.bf16.msra.mxu0 %v1659
    %1868 = vmatprep.subr.bf16.mxu0 %v1663
    %1869 = vmatpush1.bf16.msra.mxu0 %v1662
    %1870 = vmatprep.subr.bf16.mxu0 %v1666
    %1871 = vmatpush1.bf16.msra.mxu0 %v1665
    %1872 = vmatprep.subr.bf16.mxu0 %v1669
    %1873 = vmatpush1.bf16.msra.mxu0 %v1668
    %1874 = vmatprep.subr.bf16.mxu0 %v1672
    %1875 = vmatpush1.bf16.msra.mxu0 %v1671
    %1876 = vmatprep.subr.bf16.mxu0 %v1675
    %1877 = vmatpush1.bf16.msra.mxu0 %v1674
    %1878 = vmatprep.subr.bf16.mxu0 %v1678
    %1879 = vmatpush1.bf16.msra.mxu0 %v1677
    %1880 = vmatprep.subr.bf16.mxu0 %v1681
    %1881 = vmatpush1.bf16.msra.mxu0 %v1680
    %1882 = vmatprep.subr.bf16.mxu0 %v1684
    %1883 = vmatpush1.bf16.msra.mxu0 %v1683
    %1884 = vmatprep.subr.bf16.mxu0 %v1687
    %1885 = vmatpush1.bf16.msra.mxu0 %v1686
    %1886 = vmatprep.subr.bf16.mxu0 %v1690
    %1887 = vmatpush1.bf16.msra.mxu0 %v1689
    %1888 = vmatprep.subr.bf16.mxu0 %v1693
    %1889 = vmatpush1.bf16.msra.mxu0 %v1692
    %1890 = vmatprep.subr.bf16.mxu0 %v1696
    %1891 = vmatpush1.bf16.msra.mxu0 %v1695
    %1892 = vmatprep.subr.bf16.mxu0 %v1699
    %1893 = vmatpush1.bf16.msra.mxu0 %v1698
    %1894 = vmatprep.mubr.bf16.mxu0 %v1260
    %1895 = vmatmul.mubr.bf16.gmra.mrb[0].mxu0 %v1259
    %v1896 = vpop.f32.mrb[0].mxu0
    %v1897 = vadd.f32 %v1844, %v1896
    %v1898 = vpop.f32.mrb[0].mxu0
    %v1899 = vadd.f32 %v1846, %v1898
    %v1900 = vpop.f32.mrb[0].mxu0
    %v1901 = vadd.f32 %v1848, %v1900
    %v1902 = vpop.f32.mrb[0].mxu0
    %v1903 = vadd.f32 %v1850, %v1902
    %1904 = vmatprep.mubr.bf16.mxu0 %v1265
    %1905 = vmatmul.mubr.bf16.gmra.mrb[0].mxu0 %v1264
    %v1906 = vpop.f32.mrb[0].mxu0
    %v1907 = vadd.f32 %v1854, %v1906
    %v1908 = vpop.f32.mrb[0].mxu0
    %v1909 = vadd.f32 %v1856, %v1908
    %v1910 = vpop.f32.mrb[0].mxu0
    %v1911 = vadd.f32 %v1858, %v1910
    %v1912 = vpop.f32.mrb[0].mxu0
    %v1913 = vadd.f32 %v1860, %v1912
    %1914 = vdwg.mxu0
    %1915 = vmatprep.subr.bf16.mxu0 %v1702
    %1916 = vmatpush1.bf16.msra.mxu0 %v1701
    %1917 = vmatprep.subr.bf16.mxu0 0
    %1918 = vmatpush1.bf16.msra.mxu0 0
    %1919 = vmatprep.subr.bf16.mxu0 0
    %1920 = vmatpush1.bf16.msra.mxu0 0
    %1921 = vmatprep.subr.bf16.mxu0 0
    %1922 = vmatpush1.bf16.msra.mxu0 0
    %1923 = vmatprep.subr.bf16.mxu0 0
    %1924 = vmatpush1.bf16.msra.mxu0 0
    %1925 = vmatprep.subr.bf16.mxu0 0
    %1926 = vmatpush1.bf16.msra.mxu0 0
    %1927 = vmatprep.subr.bf16.mxu0 0
    %1928 = vmatpush1.bf16.msra.mxu0 0
    %1929 = vmatprep.subr.bf16.mxu0 0
    %1930 = vmatpush1.bf16.msra.mxu0 0
    %1931 = vmatprep.subr.bf16.mxu0 0
    %1932 = vmatpush1.bf16.msra.mxu0 0
    %1933 = vmatprep.subr.bf16.mxu0 0
    %1934 = vmatpush1.bf16.msra.mxu0 0
    %1935 = vmatprep.subr.bf16.mxu0 0
    %1936 = vmatpush1.bf16.msra.mxu0 0
    %1937 = vmatprep.subr.bf16.mxu0 0
    %1938 = vmatpush1.bf16.msra.mxu0 0
    %1939 = vmatprep.subr.bf16.mxu0 0
    %1940 = vmatpush1.bf16.msra.mxu0 0
    %1941 = vmatprep.subr.bf16.mxu0 0
    %1942 = vmatpush1.bf16.msra.mxu0 0
    %1943 = vmatprep.subr.bf16.mxu0 0
    %1944 = vmatpush1.bf16.msra.mxu0 0
    %1945 = vmatprep.subr.bf16.mxu0 0
    %1946 = vmatpush1.bf16.msra.mxu0 0
    %1947 = vmatprep.mubr.bf16.mxu0 0
    %1948 = vmatmul.mubr.bf16.gmra.mrb[0].mxu0 %v1804
    %v1949 = vpop.f32.mrb[0].mxu0
    %v1950 = vadd.f32 %v1897, %v1949
    %v1951 = vpop.f32.mrb[0].mxu0
    %v1952 = vadd.f32 %v1899, %v1951
    %v1953 = vpop.f32.mrb[0].mxu0
    %v1954 = vadd.f32 %v1901, %v1953
    %v1955 = vpop.f32.mrb[0].mxu0
    %v1956 = vadd.f32 %v1903, %v1955
    %1957 = vmatprep.mubr.bf16.mxu0 0
    %1958 = vmatmul.mubr.bf16.gmra.mrb[0].mxu0 %v1807
    %v1959 = vpop.f32.mrb[0].mxu0
    %v1960 = vadd.f32 %v1907, %v1959
    %v1961 = vpop.f32.mrb[0].mxu0
    %v1962 = vadd.f32 %v1909, %v1961
    %v1963 = vpop.f32.mrb[0].mxu0
    %v1964 = vadd.f32 %v1911, %v1963
    %v1965 = vpop.f32.mrb[0].mxu0
    %v1966 = vadd.f32 %v1913, %v1965
    %1967 = vdwg.mxu0
    %1968 = vmatprep.subr.bf16.mxu0 0
    %1969 = vmatpush1.bf16.msra.mxu0 %v1607
    %1970 = vmatprep.subr.bf16.mxu0 0
    %1971 = vmatpush1.bf16.msra.mxu0 %v1610
    %1972 = vmatprep.subr.bf16.mxu0 0
    %1973 = vmatpush1.bf16.msra.mxu0 %v1613
    %1974 = vmatprep.subr.bf16.mxu0 0
    %1975 = vmatpush1.bf16.msra.mxu0 %v1616
    %1976 = vmatprep.subr.bf16.mxu0 0
    %1977 = vmatpush1.bf16.msra.mxu0 %v1619
    %1978 = vmatprep.subr.bf16.mxu0 0
    %1979 = vmatpush1.bf16.msra.mxu0 %v1622
    %1980 = vmatprep.subr.bf16.mxu0 0
    %1981 = vmatpush1.bf16.msra.mxu0 %v1625
    %1982 = vmatprep.subr.bf16.mxu0 0
    %1983 = vmatpush1.bf16.msra.mxu0 %v1628
    %1984 = vmatprep.subr.bf16.mxu0 0
    %1985 = vmatpush1.bf16.msra.mxu0 %v1631
    %1986 = vmatprep.subr.bf16.mxu0 0
    %1987 = vmatpush1.bf16.msra.mxu0 %v1634
    %1988 = vmatprep.subr.bf16.mxu0 0
    %1989 = vmatpush1.bf16.msra.mxu0 %v1637
    %1990 = vmatprep.subr.bf16.mxu0 0
    %1991 = vmatpush1.bf16.msra.mxu0 %v1640
    %1992 = vmatprep.subr.bf16.mxu0 0
    %1993 = vmatpush1.bf16.msra.mxu0 %v1643
    %1994 = vmatprep.subr.bf16.mxu0 0
    %1995 = vmatpush1.bf16.msra.mxu0 %v1646
    %1996 = vmatprep.subr.bf16.mxu0 0
    %1997 = vmatpush1.bf16.msra.mxu0 %v1649
    %1998 = vmatprep.subr.bf16.mxu0 0
    %1999 = vmatpush1.bf16.msra.mxu0 %v1652
    %2000 = vmatprep.mubr.bf16.mxu0 %v1258
    %2001 = vmatmul.mubr.bf16.gmra.mrb[0].mxu0 %v1257
    %v2002 = vpop.f32.mrb[0].mxu0
    %v2003 = vadd.f32 0.0, %v2002
    %v2004 = vpop.f32.mrb[0].mxu0
    %v2005 = vpop.f32.mrb[0].mxu0
    %v2006 = vadd.f32 0.0, %v2005
    %v2007 = vpop.f32.mrb[0].mxu0
    %2008 = vmatprep.mubr.bf16.mxu0 %v1263
    %2009 = vmatmul.mubr.bf16.gmra.mrb[0].mxu0 %v1262
    %v2010 = vpop.f32.mrb[0].mxu0
    %v2011 = vadd.f32 0.0, %v2010
    %v2012 = vpop.f32.mrb[0].mxu0
    %v2013 = vpop.f32.mrb[0].mxu0
    %v2014 = vadd.f32 0.0, %v2013
    %v2015 = vpop.f32.mrb[0].mxu0
    %2016 = vdwg.mxu0
    %2017 = vmatprep.subr.bf16.mxu0 0
    %2018 = vmatpush1.bf16.msra.mxu0 %v1655
    %2019 = vmatprep.subr.bf16.mxu0 0
    %2020 = vmatpush1.bf16.msra.mxu0 %v1658
    %2021 = vmatprep.subr.bf16.mxu0 0
    %2022 = vmatpush1.bf16.msra.mxu0 %v1661
    %2023 = vmatprep.subr.bf16.mxu0 0
    %2024 = vmatpush1.bf16.msra.mxu0 %v1664
    %2025 = vmatprep.subr.bf16.mxu0 0
    %2026 = vmatpush1.bf16.msra.mxu0 %v1667
    %2027 = vmatprep.subr.bf16.mxu0 0
    %2028 = vmatpush1.bf16.msra.mxu0 %v1670
    %2029 = vmatprep.subr.bf16.mxu0 0
    %2030 = vmatpush1.bf16.msra.mxu0 %v1673
    %2031 = vmatprep.subr.bf16.mxu0 0
    %2032 = vmatpush1.bf16.msra.mxu0 %v1676
    %2033 = vmatprep.subr.bf16.mxu0 0
    %2034 = vmatpush1.bf16.msra.mxu0 %v1679
    %2035 = vmatprep.subr.bf16.mxu0 0
    %2036 = vmatpush1.bf16.msra.mxu0 %v1682
    %2037 = vmatprep.subr.bf16.mxu0 0
    %2038 = vmatpush1.bf16.msra.mxu0 %v1685
    %2039 = vmatprep.subr.bf16.mxu0 0
    %2040 = vmatpush1.bf16.msra.mxu0 %v1688
    %2041 = vmatprep.subr.bf16.mxu0 0
    %2042 = vmatpush1.bf16.msra.mxu0 %v1691
    %2043 = vmatprep.subr.bf16.mxu0 0
    %2044 = vmatpush1.bf16.msra.mxu0 %v1694
    %2045 = vmatprep.subr.bf16.mxu0 0
    %2046 = vmatpush1.bf16.msra.mxu0 %v1697
    %2047 = vmatprep.subr.bf16.mxu0 0
    %2048 = vmatpush1.bf16.msra.mxu0 %v1700
    %2049 = vmatprep.mubr.bf16.mxu0 %v1260
    %2050 = vmatmul.mubr.bf16.gmra.mrb[0].mxu0 %v1259
    %v2051 = vpop.f32.mrb[0].mxu0
    %v2052 = vadd.f32 %v2003, %v2051
    %v2053 = vpop.f32.mrb[0].mxu0
    %v2054 = vpop.f32.mrb[0].mxu0
    %v2055 = vadd.f32 %v2006, %v2054
    %v2056 = vpop.f32.mrb[0].mxu0
    %2057 = vmatprep.mubr.bf16.mxu0 %v1265
    %2058 = vmatmul.mubr.bf16.gmra.mrb[0].mxu0 %v1264
    %v2059 = vpop.f32.mrb[0].mxu0
    %v2060 = vadd.f32 %v2011, %v2059
    %v2061 = vpop.f32.mrb[0].mxu0
    %v2062 = vpop.f32.mrb[0].mxu0
    %v2063 = vadd.f32 %v2014, %v2062
    %v2064 = vpop.f32.mrb[0].mxu0
    %2065 = vdwg.mxu0
    %2066 = vmatprep.subr.bf16.mxu0 0
    %2067 = vmatpush1.bf16.msra.mxu0 %v1703
    %2068 = vmatprep.subr.bf16.mxu0 0
    %2069 = vmatpush1.bf16.msra.mxu0 0
    %2070 = vmatprep.subr.bf16.mxu0 0
    %2071 = vmatpush1.bf16.msra.mxu0 0
    %2072 = vmatprep.subr.bf16.mxu0 0
    %2073 = vmatpush1.bf16.msra.mxu0 0
    %2074 = vmatprep.subr.bf16.mxu0 0
    %2075 = vmatpush1.bf16.msra.mxu0 0
    %2076 = vmatprep.subr.bf16.mxu0 0
    %2077 = vmatpush1.bf16.msra.mxu0 0
    %2078 = vmatprep.subr.bf16.mxu0 0
    %2079 = vmatpush1.bf16.msra.mxu0 0
    %2080 = vmatprep.subr.bf16.mxu0 0
    %2081 = vmatpush1.bf16.msra.mxu0 0
    %2082 = vmatprep.subr.bf16.mxu0 0
    %2083 = vmatpush1.bf16.msra.mxu0 0
    %2084 = vmatprep.subr.bf16.mxu0 0
    %2085 = vmatpush1.bf16.msra.mxu0 0
    %2086 = vmatprep.subr.bf16.mxu0 0
    %2087 = vmatpush1.bf16.msra.mxu0 0
    %2088 = vmatprep.subr.bf16.mxu0 0
    %2089 = vmatpush1.bf16.msra.mxu0 0
    %2090 = vmatprep.subr.bf16.mxu0 0
    %2091 = vmatpush1.bf16.msra.mxu0 0
    %2092 = vmatprep.subr.bf16.mxu0 0
    %2093 = vmatpush1.bf16.msra.mxu0 0
    %2094 = vmatprep.subr.bf16.mxu0 0
    %2095 = vmatpush1.bf16.msra.mxu0 0
    %2096 = vmatprep.subr.bf16.mxu0 0
    %2097 = vmatpush1.bf16.msra.mxu0 0
    %2098 = vmatprep.mubr.bf16.mxu0 0
    %2099 = vmatmul.mubr.bf16.gmra.mrb[0].mxu0 %v1804
    %v2100 = vpop.f32.mrb[0].mxu0
    %v2101 = vadd.f32 %v2052, %v2100
    %v2102 = vpop.f32.mrb[0].mxu0
    %v2103 = vpop.f32.mrb[0].mxu0
    %v2104 = vadd.f32 %v2055, %v2103
    %v2105 = vpop.f32.mrb[0].mxu0
    %2106 = vmatprep.mubr.bf16.mxu0 0
    %2107 = vmatmul.mubr.bf16.gmra.mrb[0].mxu0 %v1807
    %v2108 = vpop.f32.mrb[0].mxu0
    %v2109 = vadd.f32 %v2060, %v2108
    %v2110 = vpop.f32.mrb[0].mxu0
    %v2111 = vpop.f32.mrb[0].mxu0
    %v2112 = vadd.f32 %v2063, %v2111
    %v2113 = vpop.f32.mrb[0].mxu0
    %2114 = vdwg.mxu0
    %vm2115 = vcmp.gt.f32.partialorder %v1950, 0.0
    %vm2116 = vcmp.gt.f32.partialorder %v1952, 0.0
    %vm2117 = vcmp.gt.f32.partialorder %v2101, 0.0
    %vm2118 = vcmp.gt.f32.partialorder %v1954, 0.0
    %vm2119 = vcmp.gt.f32.partialorder %v1956, 0.0
    %vm2120 = vcmp.gt.f32.partialorder %v2104, 0.0
    %vm2121 = vcmp.gt.f32.partialorder %v1960, 0.0
    %vm2122 = vcmp.gt.f32.partialorder %v1962, 0.0
    %vm2123 = vcmp.gt.f32.partialorder %v2109, 0.0
    %vm2124 = vcmp.gt.f32.partialorder %v1964, 0.0
    %vm2125 = vcmp.gt.f32.partialorder %v1966, 0.0
    %vm2126 = vcmp.gt.f32.partialorder %v2112, 0.0
    %v2127 = vsel %vm2115, 2.63601, -3.4690156
    %v2128 = vsel %vm2116, 2.63601, -3.4690156
    %v2129 = vsel %vm2117, 2.63601, -3.4690156
    %v2130 = vsel %vm2118, 2.63601, -3.4690156
    %v2131 = vsel %vm2119, 2.63601, -3.4690156
    %v2132 = vsel %vm2120, 2.63601, -3.4690156
    %v2133 = vsel %vm2121, 2.63601, -3.4690156
    %v2134 = vsel %vm2122, 2.63601, -3.4690156
    %v2135 = vsel %vm2123, 2.63601, -3.4690156
    %v2136 = vsel %vm2124, 2.63601, -3.4690156
    %v2137 = vsel %vm2125, 2.63601, -3.4690156
    %v2138 = vsel %vm2126, 2.63601, -3.4690156
    %v2139 = vmul.f32 %v916, %v2127
    %v2140 = vmul.f32 %v918, %v2128
    %v2141 = vmul.f32 %v1067, %v2129
    %v2142 = vmul.f32 %v920, %v2130
    %v2143 = vmul.f32 %v922, %v2131
    %v2144 = vmul.f32 %v1070, %v2132
    %v2145 = vmul.f32 %v926, %v2133
    %v2146 = vmul.f32 %v928, %v2134
    %v2147 = vmul.f32 %v1075, %v2135
    %v2148 = vmul.f32 %v930, %v2136
    %v2149 = vmul.f32 %v932, %v2137
    %v2150 = vmul.f32 %v1078, %v2138
    %2151 = vst [vmem:[%s4] sm:$0xff] %v2139
    %2152 = vst [vmem:[%s4 + $0x8] sm:$0xff] %v2140
    %2153 = vst [vmem:[%s4 + $0x10] sm:$0xff] %v2141
    %2154 = vst [vmem:[%s4 + $0x18] sm:$0xff] %v2142
    %2155 = vst [vmem:[%s4 + $0x20] sm:$0xff] %v2143
    %2156 = vst [vmem:[%s4 + $0x28] sm:$0xff] %v2144
    %2157 = vst [vmem:[%s4 + $0x30] sm:$0xff] %v2145
    %2158 = vst [vmem:[%s4 + $0x38] sm:$0xff] %v2146
    %2159 = vst [vmem:[%s4 + $0x40] sm:$0xff] %v2147
    %2160 = vst [vmem:[%s4 + $0x48] sm:$0xff] %v2148
    %2161 = vst [vmem:[%s4 + $0x50] sm:$0xff] %v2149
    %2162 = vst [vmem:[%s4 + $0x58] sm:$0xff] %v2150
    // Predicated region
    $region26: #{model_forward.1} parent=1 // pred_check
      _
    $region27: #{model_forward.1} parent=1 // pred_check_branch
      %2164 = sbr.rel (0) target = $region29
    $region28: #{model_forward.1} parent=1 // pred_region
      _
    $region29: #{model_forward.1} parent=1 // pred_fallthru
      _
    // Predicated region
    $region30: #{model_forward.1} parent=1 // pred_check
      _
    $region31: #{model_forward.1} parent=1 // pred_check_branch
      %2166 = sbr.rel (0) target = $region33
    $region32: #{model_forward.1} parent=1 // pred_region
      _
    $region33: #{model_forward.1} parent=1 // pred_fallthru
      _
    %2167 = vsyncpa [#allocation3], 1
    %2168 = vsyncpa [#allocation5], 1

</llo_original>
